<compile_context>
chip_gen: v5e
topology: v5e:2x2
jax: 0.10.0
libtpu: 0.0.40
codegen_flags: <defaults>
</compile_context>

<pallas_src>
import functools

import jax
import jax.numpy as jnp
from jax import lax
from jax.experimental import pallas as pl
from jax.experimental.pallas import tpu as pltpu

LIPSWISH_SCALE = 0.909
DT = 0.05


def _generator_kernel(num_layers, hidden, chunk, unroll,
                      x0_ref,                 # (TB, Din)        f32  (resident per batch tile)
                      dw_ref,                 # (CH, TB, H)      bf16 (streamed per chunk)
                      tb_ref,                 # (CH, 1, 2H)      f32  (t*[wt_in|wt_g]+[b_in|b_g])
                      dts_ref,                # (CH, 1, 1)       f32  (per-step dt)
                      w_init_ref, b_init_ref, # (Din, H) f32, (1, H) f32
                      w_yg_ref,               # (H, 2H)  bf16   fused [w_in | w_g]
                      w_hid_ref, b_hid_ref,   # (L, H, H) bf16 (pre-scaled), (L, 1, H) f32
                      w_fout_ref, b_fout_ref, # (H, H)   bf16 (pre-scaled), (1, H) f32
                      w_cls_ref, b_cls_ref,   # (H, Cp)  f32,  (1, Cp) f32
                      out_ref,                # (TB, Cp) f32
                      y_ref):                 # scratch (TB, H) f32 — SDE state carried over chunks
    c = pl.program_id(1)
    H = hidden
    wdt = w_yg_ref.dtype
    f32 = jnp.float32

    # --- y0 = initial(X.evaluate(times))[:, 0, :]  (once per batch tile) ---
    @pl.when(c == 0)
    def _():
        y_ref[...] = (jnp.dot(x0_ref[...], w_init_ref[...], preferred_element_type=f32)
                      + b_init_ref[...])

    def euler_step(i, y):
        # y is carried functionally through the fori_loop; bf16 cast only for the MXU.
        # (Note: bf16 LHS accumulates slightly more rounding than the f32 PyTorch original.)
        y16 = y.astype(wdt)
        tb_i = tb_ref[i]                                            # (1, 2H)
        if H % 128 == 0:
            # Fused [f_input | g] matmul; split is a free lane-aligned view.
            yz = jnp.dot(y16, w_yg_ref[...], preferred_element_type=f32) + tb_i
            pre_h = yz[:, :H]
            pre_g = yz[:, H:]
        else:
            # Unaligned H: two dots sharing LHS so no cross-tile lane shuffles per step.
            pre_h = jnp.dot(y16, w_yg_ref[:, :H], preferred_element_type=f32) + tb_i[:, :H]
            pre_g = jnp.dot(y16, w_yg_ref[:, H:], preferred_element_type=f32) + tb_i[:, H:]

        h = pre_h * jax.nn.sigmoid(pre_h)     # swish; 0.909 folded into downstream weights
        g = jnp.tanh(pre_g)                   # diagonal diffusion

        for l in range(num_layers):           # static unroll over hidden layers
            z = (jnp.dot(h.astype(wdt), w_hid_ref[l], preferred_element_type=f32)
                 + b_hid_ref[l])
            h = z * jax.nn.sigmoid(z)
        f = jnp.tanh(jnp.dot(h.astype(wdt), w_fout_ref[...], preferred_element_type=f32)
                     + b_fout_ref[...])

        return y + f * dts_ref[i] + g * dw_ref[i].astype(f32)

    y_new = lax.fori_loop(0, chunk, euler_step, y_ref[...], unroll=unroll)
    y_ref[...] = y_new

    # --- pred_y = classifier(z_t[final_index])  (once per batch tile) ---
    @pl.when(c == pl.num_programs(1) - 1)
    def _():
        out_ref[...] = (jnp.dot(y_new, w_cls_ref[...], preferred_element_type=f32)
                        + b_cls_ref[...])


def generator_forward(coeffs, times, dw, params, num_layers, *,
                      batch_tile=None, steps_per_chunk=8, weight_dtype=jnp.bfloat16):
    B, S, Din = coeffs.shape
    H = params["w_init"].shape[1]
    C = params["w_cls"].shape[1]
    n_steps = dw.shape[0]
    assert n_steps == S - 1 and times.shape[0] == S
    assert dw.shape == (n_steps, B, H)

    # Batch tiling. Default 128 keeps full MXU rows and >=2 tiles once B >= 256 (v7x 2-TC);
    # pass batch_tile=256 on v6e for a fuller 2x256 MXU, or a smaller tile to split B on v7x.
    TB = batch_tile or min(B, 128)
    assert B % TB == 0 and (TB % 8 == 0 or TB == B)
    nb = B // TB

    # Euler steps per grid iteration: largest divisor of n_steps <= steps_per_chunk, so the
    # per-grid-step pipeline overhead (~0.4us) is amortized and dW moves as one bigger DMA.
    chunk = 1
    for d in range(min(steps_per_chunk, n_steps), 0, -1):
        if n_steps % d == 0:
            chunk = d
            break
    n_chunks = n_steps // chunk
    unroll = chunk <= 8

    f32 = jnp.float32
    wdt = weight_dtype
    C_pad = max(128, ((C + 127) // 128) * 128)           # lane-dense classifier output

    # Only the first knot of the control path is ever consumed.
    x0 = coeffs[:, 0, :].astype(f32)                      # (B, Din)

    # Fuse the two matmuls sharing LHS y; fold the time term into a per-step bias table.
    w_yg = jnp.concatenate([params["w_in"], params["w_g"]], axis=1).astype(wdt)   # (H, 2H)
    wt_yg = jnp.concatenate([params["wt_in"], params["wt_g"]], axis=1)            # (1, 2H)
    b_yg = jnp.concatenate([params["b_in"], params["b_g"]], axis=1)               # (1, 2H)
    tb = (times[:n_steps, None] * wt_yg + b_yg).astype(f32).reshape(n_steps, 1, 2 * H)

    # Per-step integration step sizes (handles non-uniform `times`; == DT when knots are
    # spaced by the sdeint dt, as in the original module).
    dts = jnp.diff(times).astype(f32).reshape(n_steps, 1, 1)

    # Halve the only O(n_steps*B*H) HBM stream (restored to f32 in-kernel).
    dw_bf16 = dw.astype(jnp.bfloat16)

    # Hot-loop weights -> bf16 for the MXU; LipSwish's 0.909 folded into downstream weights.
    w_init = params["w_init"].astype(f32)
    b_init = params["b_init"].astype(f32)
    w_hid = (params["w_hid"] * LIPSWISH_SCALE).astype(wdt)
    b_hid = params["b_hid"].astype(f32)
    w_fout = (params["w_fout"] * LIPSWISH_SCALE).astype(wdt)
    b_fout = params["b_fout"].astype(f32)
    w_cls = jnp.zeros((H, C_pad), f32).at[:, :C].set(params["w_cls"].astype(f32))
    b_cls = jnp.zeros((1, C_pad), f32).at[:, :C].set(params["b_cls"].astype(f32))

    weights = (w_init, b_init, w_yg, w_hid, b_hid, w_fout, b_fout, w_cls, b_cls)

    def full_spec(a):
        nd = a.ndim
        return pl.BlockSpec(a.shape, lambda b, c, _nd=nd: (0,) * _nd)

    in_specs = [
        pl.BlockSpec((TB, Din), lambda b, c: (b, 0)),              # x0: resident per batch tile
        pl.BlockSpec((chunk, TB, H), lambda b, c: (c, b, 0)),      # dW: one DMA per CH steps
        pl.BlockSpec((chunk, 1, 2 * H), lambda b, c: (c, 0, 0)),   # time-bias table per chunk
        pl.BlockSpec((chunk, 1, 1), lambda b, c: (c, 0, 0)),       # per-step dt per chunk
    ] + [full_spec(w) for w in weights]                            # weights: resident

    out_specs = pl.BlockSpec((TB, C_pad), lambda b, c: (b, 0))

    # VMEM budget derived from actual residency + chip capacity (no fixed clamp).
    # Weights are counted x2 because Pallas allocates double buffers even for constant blocks.
    def nbytes(a):
        return int(a.size) * a.dtype.itemsize

    weight_bytes = sum(nbytes(w) for w in weights)
    stream_block_bytes = (TB * Din * 4 + chunk * TB * H * 2 + chunk * 2 * H * 4
                          + chunk * 4 + TB * C_pad * 4)
    est = 2 * weight_bytes + 2 * stream_block_bytes + TB * H * 4 + (4 << 20)
    try:
        vmem_cap = int(pltpu.get_tpu_info().vmem_capacity_bytes)
    except Exception:
        vmem_cap = 64 << 20                                        # conservative (v7x per-TC)
    vmem_limit = int(min(max(est, 16 << 20), int(vmem_cap * 0.9)))

    out = pl.pallas_call(
        functools.partial(_generator_kernel, num_layers, H, chunk, unroll),
        out_shape=jax.ShapeDtypeStruct((B, C_pad), f32),
        grid=(nb, n_chunks),
        in_specs=in_specs,
        out_specs=out_specs,
        scratch_shapes=[pltpu.VMEM((TB, H), f32)],
        compiler_params=pltpu.CompilerParams(
            dimension_semantics=("parallel", "arbitrary"),
            vmem_limit_bytes=vmem_limit,
        ),
    )(x0, dw_bf16, tb, dts, *weights)

    return out[:, :C]


def generator_reference(coeffs, times, dw, params, num_layers, weight_dtype=jnp.bfloat16):
    """Pure-JAX reference mirroring the kernel's dtype strategy (bf16 weights, bf16 dW)."""
    f32 = jnp.float32

    def mm(a, w, dt=weight_dtype):
        return jnp.dot(a.astype(dt), w.astype(dt), preferred_element_type=f32)

    def lipswish(x):
        return LIPSWISH_SCALE * x * jax.nn.sigmoid(x)

    dw = dw.astype(jnp.bfloat16).astype(f32)          # mirror the kernel's bf16 dW stream
    dts = jnp.diff(times).astype(f32)
    x0 = coeffs[:, 0, :].astype(f32)
    y = mm(x0, params["w_init"], f32) + params["b_init"]
    for i in range(dw.shape[0]):
        t = times[i]
        h = lipswish(mm(y, params["w_in"]) + t * params["wt_in"] + params["b_in"])
        for l in range(num_layers):
            h = lipswish(mm(h, params["w_hid"][l]) + params["b_hid"][l])
        f = jnp.tanh(mm(h, params["w_fout"]) + params["b_fout"])
        g = jnp.tanh(mm(y, params["w_g"]) + t * params["wt_g"] + params["b_g"])
        y = y + f * dts[i] + g * dw[i]
    return mm(y, params["w_cls"], f32) + params["b_cls"]


def init_params(key, input_dim, hidden_dim, num_classes, num_layers, scale=0.1):
    ks = jax.random.split(key, 8)
    f32 = jnp.float32
    return {
        "w_init": jax.random.normal(ks[0], (input_dim, hidden_dim), f32) * scale,
        "b_init": jnp.zeros((1, hidden_dim), f32),
        "w_in":   jax.random.normal(ks[1], (hidden_dim, hidden_dim), f32) * scale,
        "wt_in":  jax.random.normal(ks[2], (1, hidden_dim), f32) * scale,
        "b_in":   jnp.zeros((1, hidden_dim), f32),
        "w_hid":  jax.random.normal(ks[3], (num_layers, hidden_dim, hidden_dim), f32) * scale,
        "b_hid":  jnp.zeros((num_layers, 1, hidden_dim), f32),
        "w_fout": jax.random.normal(ks[4], (hidden_dim, hidden_dim), f32) * scale,
        "b_fout": jnp.zeros((1, hidden_dim), f32),
        "w_g":    jax.random.normal(ks[5], (hidden_dim, hidden_dim), f32) * scale,
        "wt_g":   jax.random.normal(ks[6], (1, hidden_dim), f32) * scale,
        "b_g":    jnp.zeros((1, hidden_dim), f32),
        "w_cls":  jax.random.normal(ks[7], (hidden_dim, num_classes), f32) * scale,
        "b_cls":  jnp.zeros((1, num_classes), f32),
    }


if __name__ == "__main__":
    # Small deterministic example (production configs should use H, batch multiples of 128).
    B, S, Din, H, C, L = 8, 9, 4, 32, 4, 2

    key = jax.random.PRNGKey(0)
    k_coeffs, k_dw, k_params = jax.random.split(key, 3)

    coeffs = jax.random.normal(k_coeffs, (B, S, Din), jnp.float32)
    times = jnp.arange(S, dtype=jnp.float32) * DT        # knot spacing == sdeint dt
    n_steps = S - 1                                      # integrate times[0] -> times[-1]
    dw = jax.random.normal(k_dw, (n_steps, B, H), jnp.float32) * jnp.sqrt(jnp.float32(DT))

    params = init_params(k_params, Din, H, C, L)

    pred_y = generator_forward(coeffs, times, dw, params, L)
    pred_y = jax.block_until_ready(pred_y)

    assert pred_y.shape == (B, C)
    assert pred_y.dtype == jnp.float32
    assert bool(jnp.all(jnp.isfinite(pred_y)))

    ref = jax.block_until_ready(generator_reference(coeffs, times, dw, params, L))
    assert bool(jnp.allclose(pred_y, ref, rtol=2e-2, atol=2e-2))

    print("KERNEL_OK")
</pallas_src>

<mosaic_0001>
module attributes {stable_mosaic.version = 11 : i64} {
  func.func @_generator_kernel(%arg0: i32, %arg1: i32, %arg2: memref<8x4xf32, #tpu.memory_space<vmem>>, %arg3: memref<8x8x32xbf16, #tpu.memory_space<vmem>>, %arg4: memref<8x1x64xf32, #tpu.memory_space<vmem>>, %arg5: memref<8x1x1xf32, #tpu.memory_space<vmem>>, %arg6: memref<4x32xf32, #tpu.memory_space<vmem>>, %arg7: memref<1x32xf32, #tpu.memory_space<vmem>>, %arg8: memref<32x64xbf16, #tpu.memory_space<vmem>>, %arg9: memref<2x32x32xbf16, #tpu.memory_space<vmem>>, %arg10: memref<2x1x32xf32, #tpu.memory_space<vmem>>, %arg11: memref<32x32xbf16, #tpu.memory_space<vmem>>, %arg12: memref<1x32xf32, #tpu.memory_space<vmem>>, %arg13: memref<32x128xf32, #tpu.memory_space<vmem>>, %arg14: memref<1x128xf32, #tpu.memory_space<vmem>>, %arg15: memref<8x128xf32, #tpu.memory_space<vmem>>, %arg16: memref<8x32xf32, #tpu.memory_space<vmem>>) attributes {dimension_semantics = [#tpu.dimension_semantics<parallel>, #tpu.dimension_semantics<arbitrary>], iteration_bounds = array<i64: 1, 1>, scalar_prefetch = 0 : i64, scratch_operands = 1 : i64, tpu.core_type = #tpu.core_type<tc>, window_params = [{transform_indices = @transform_0, window_bounds = array<i64: 8, 4>}, {transform_indices = @transform_1, window_bounds = array<i64: 8, 8, 32>}, {transform_indices = @transform_2, window_bounds = array<i64: 8, 1, 64>}, {transform_indices = @transform_3, window_bounds = array<i64: 8, 1, 1>}, {pipeline_mode = #tpu.pipeline_mode<synchronous>, transform_indices = @transform_4, window_bounds = array<i64: 4, 32>}, {pipeline_mode = #tpu.pipeline_mode<synchronous>, transform_indices = @transform_5, window_bounds = array<i64: 1, 32>}, {pipeline_mode = #tpu.pipeline_mode<synchronous>, transform_indices = @transform_6, window_bounds = array<i64: 32, 64>}, {pipeline_mode = #tpu.pipeline_mode<synchronous>, transform_indices = @transform_7, window_bounds = array<i64: 2, 32, 32>}, {pipeline_mode = #tpu.pipeline_mode<synchronous>, transform_indices = @transform_8, window_bounds = array<i64: 2, 1, 32>}, {pipeline_mode = #tpu.pipeline_mode<synchronous>, transform_indices = @transform_9, window_bounds = array<i64: 32, 32>}, {pipeline_mode = #tpu.pipeline_mode<synchronous>, transform_indices = @transform_10, window_bounds = array<i64: 1, 32>}, {pipeline_mode = #tpu.pipeline_mode<synchronous>, transform_indices = @transform_11, window_bounds = array<i64: 32, 128>}, {pipeline_mode = #tpu.pipeline_mode<synchronous>, transform_indices = @transform_12, window_bounds = array<i64: 1, 128>}, {transform_indices = @transform_13, window_bounds = array<i64: 8, 128>}]} {
    %c0_i32 = arith.constant 0 : i32
    %0 = arith.cmpi eq, %arg1, %c0_i32 : i32
    %1 = arith.extui %0 : i1 to i32
    %c0_i32_0 = arith.constant 0 : i32
    %2 = arith.cmpi ne, %1, %c0_i32_0 : i32
    scf.if %2 {
      %c0_276 = arith.constant 0 : index
      %c0_277 = arith.constant 0 : index
      %552 = vector.load %arg2[%c0_276, %c0_277] : memref<8x4xf32, #tpu.memory_space<vmem>>, vector<8x4xf32>
      %c0_278 = arith.constant 0 : index
      %c0_279 = arith.constant 0 : index
      %553 = vector.load %arg6[%c0_278, %c0_279] : memref<4x32xf32, #tpu.memory_space<vmem>>, vector<4x32xf32>
      %cst_280 = arith.constant dense<0.000000e+00> : vector<8x32xf32>
      %554 = tpu.matmul %552, %553, %cst_280 {dimension_numbers = #tpu.dot_dimension_numbers<[1], [0], [0], [1], [0, 0, 1, 1], [], []>} : vector<8x4xf32>, vector<4x32xf32>, vector<8x32xf32> -> vector<8x32xf32>
      %c0_281 = arith.constant 0 : index
      %c0_282 = arith.constant 0 : index
      %555 = vector.load %arg7[%c0_281, %c0_282] : memref<1x32xf32, #tpu.memory_space<vmem>>, vector<1x32xf32>
      %556 = vector.broadcast %555 : vector<1x32xf32> to vector<8x32xf32>
      %557 = arith.addf %554, %556 : vector<8x32xf32>
      %c0_283 = arith.constant 0 : index
      %c0_284 = arith.constant 0 : index
      %558 = vector.load %arg16[%c0_283, %c0_284] : memref<8x32xf32, #tpu.memory_space<vmem>>, vector<8x32xf32>
      tpu.vector_store %arg16[%c0_283, %c0_284], %557 {strides = array<i32>} : memref<8x32xf32, #tpu.memory_space<vmem>>, vector<8x32xf32>,
    } else {
    }
    %c0 = arith.constant 0 : index
    %c0_1 = arith.constant 0 : index
    %3 = vector.load %arg16[%c0, %c0_1] : memref<8x32xf32, #tpu.memory_space<vmem>>, vector<8x32xf32>
    %c0_i32_2 = arith.constant 0 : i32
    %4 = arith.truncf %3 : vector<8x32xf32> to vector<8x32xbf16>
    %5 = arith.index_cast %c0_i32_2 : i32 to index
    %c0_3 = arith.constant 0 : index
    %c0_4 = arith.constant 0 : index
    %6 = vector.load %arg4[%5, %c0_3, %c0_4] : memref<8x1x64xf32, #tpu.memory_space<vmem>>, vector<1x1x64xf32>
    %7 = vector.shape_cast %6 : vector<1x1x64xf32> to vector<1x64xf32>
    %c0_5 = arith.constant 0 : index
    %c0_6 = arith.constant 0 : index
    %8 = vector.load %arg8[%c0_5, %c0_6] : memref<32x64xbf16, #tpu.memory_space<vmem>>, vector<32x32xbf16>
    %cst = arith.constant dense<0.000000e+00> : vector<8x32xf32>
    %9 = tpu.matmul %4, %8, %cst {dimension_numbers = #tpu.dot_dimension_numbers<[1], [0], [0], [1], [0, 0, 1, 1], [], []>} : vector<8x32xbf16>, vector<32x32xbf16>, vector<8x32xf32> -> vector<8x32xf32>
    %10 = vector.extract_strided_slice %7 {offsets = [0, 0], sizes = [1, 32], strides = [1, 1]} : vector<1x64xf32> to vector<1x32xf32>
    %11 = vector.broadcast %10 : vector<1x32xf32> to vector<8x32xf32>
    %12 = arith.addf %9, %11 : vector<8x32xf32>
    %c0_7 = arith.constant 0 : index
    %c32 = arith.constant 32 : index
    %13 = vector.load %arg8[%c0_7, %c32] : memref<32x64xbf16, #tpu.memory_space<vmem>>, vector<32x32xbf16>
    %cst_8 = arith.constant dense<0.000000e+00> : vector<8x32xf32>
    %14 = tpu.matmul %4, %13, %cst_8 {dimension_numbers = #tpu.dot_dimension_numbers<[1], [0], [0], [1], [0, 0, 1, 1], [], []>} : vector<8x32xbf16>, vector<32x32xbf16>, vector<8x32xf32> -> vector<8x32xf32>
    %15 = vector.extract_strided_slice %7 {offsets = [0, 32], sizes = [1, 32], strides = [1, 1]} : vector<1x64xf32> to vector<1x32xf32>
    %16 = vector.broadcast %15 : vector<1x32xf32> to vector<8x32xf32>
    %17 = arith.addf %14, %16 : vector<8x32xf32>
    %18 = arith.negf %12 : vector<8x32xf32>
    %19 = math.exp %18 : vector<8x32xf32>
    %cst_9 = arith.constant 1.000000e+00 : f32
    %20 = vector.broadcast %cst_9 : f32 to vector<8x32xf32>
    %21 = arith.addf %20, %19 : vector<8x32xf32>
    %22 = arith.divf %20, %21 : vector<8x32xf32>
    %23 = arith.mulf %12, %22 : vector<8x32xf32>
    %24 = math.tanh %17 : vector<8x32xf32>
    %25 = arith.truncf %23 : vector<8x32xf32> to vector<8x32xbf16>
    %c0_10 = arith.constant 0 : index
    %c0_11 = arith.constant 0 : index
    %c0_12 = arith.constant 0 : index
    %26 = vector.load %arg9[%c0_10, %c0_11, %c0_12] : memref<2x32x32xbf16, #tpu.memory_space<vmem>>, vector<1x32x32xbf16>
    %27 = vector.shape_cast %26 : vector<1x32x32xbf16> to vector<32x32xbf16>
    %cst_13 = arith.constant dense<0.000000e+00> : vector<8x32xf32>
    %28 = tpu.matmul %25, %27, %cst_13 {dimension_numbers = #tpu.dot_dimension_numbers<[1], [0], [0], [1], [0, 0, 1, 1], [], []>} : vector<8x32xbf16>, vector<32x32xbf16>, vector<8x32xf32> -> vector<8x32xf32>
    %c0_14 = arith.constant 0 : index
    %c0_15 = arith.constant 0 : index
    %c0_16 = arith.constant 0 : index
    %29 = vector.load %arg10[%c0_14, %c0_15, %c0_16] : memref<2x1x32xf32, #tpu.memory_space<vmem>>, vector<1x1x32xf32>
    %30 = vector.shape_cast %29 : vector<1x1x32xf32> to vector<1x32xf32>
    %31 = vector.broadcast %30 : vector<1x32xf32> to vector<8x32xf32>
    %32 = arith.addf %28, %31 : vector<8x32xf32>
    %33 = arith.negf %32 : vector<8x32xf32>
    %34 = math.exp %33 : vector<8x32xf32>
    %cst_17 = arith.constant 1.000000e+00 : f32
    %35 = vector.broadcast %cst_17 : f32 to vector<8x32xf32>
    %36 = arith.addf %35, %34 : vector<8x32xf32>
    %37 = arith.divf %35, %36 : vector<8x32xf32>
    %38 = arith.mulf %32, %37 : vector<8x32xf32>
    %39 = arith.truncf %38 : vector<8x32xf32> to vector<8x32xbf16>
    %c1 = arith.constant 1 : index
    %c0_18 = arith.constant 0 : index
    %c0_19 = arith.constant 0 : index
    %40 = vector.load %arg9[%c1, %c0_18, %c0_19] : memref<2x32x32xbf16, #tpu.memory_space<vmem>>, vector<1x32x32xbf16>
    %41 = vector.shape_cast %40 : vector<1x32x32xbf16> to vector<32x32xbf16>
    %cst_20 = arith.constant dense<0.000000e+00> : vector<8x32xf32>
    %42 = tpu.matmul %39, %41, %cst_20 {dimension_numbers = #tpu.dot_dimension_numbers<[1], [0], [0], [1], [0, 0, 1, 1], [], []>} : vector<8x32xbf16>, vector<32x32xbf16>, vector<8x32xf32> -> vector<8x32xf32>
    %c1_21 = arith.constant 1 : index
    %c0_22 = arith.constant 0 : index
    %c0_23 = arith.constant 0 : index
    %43 = vector.load %arg10[%c1_21, %c0_22, %c0_23] : memref<2x1x32xf32, #tpu.memory_space<vmem>>, vector<1x1x32xf32>
    %44 = vector.shape_cast %43 : vector<1x1x32xf32> to vector<1x32xf32>
    %45 = vector.broadcast %44 : vector<1x32xf32> to vector<8x32xf32>
    %46 = arith.addf %42, %45 : vector<8x32xf32>
    %47 = arith.negf %46 : vector<8x32xf32>
    %48 = math.exp %47 : vector<8x32xf32>
    %cst_24 = arith.constant 1.000000e+00 : f32
    %49 = vector.broadcast %cst_24 : f32 to vector<8x32xf32>
    %50 = arith.addf %49, %48 : vector<8x32xf32>
    %51 = arith.divf %49, %50 : vector<8x32xf32>
    %52 = arith.mulf %46, %51 : vector<8x32xf32>
    %53 = arith.truncf %52 : vector<8x32xf32> to vector<8x32xbf16>
    %c0_25 = arith.constant 0 : index
    %c0_26 = arith.constant 0 : index
    %54 = vector.load %arg11[%c0_25, %c0_26] : memref<32x32xbf16, #tpu.memory_space<vmem>>, vector<32x32xbf16>
    %cst_27 = arith.constant dense<0.000000e+00> : vector<8x32xf32>
    %55 = tpu.matmul %53, %54, %cst_27 {dimension_numbers = #tpu.dot_dimension_numbers<[1], [0], [0], [1], [0, 0, 1, 1], [], []>} : vector<8x32xbf16>, vector<32x32xbf16>, vector<8x32xf32> -> vector<8x32xf32>
    %c0_28 = arith.constant 0 : index
    %c0_29 = arith.constant 0 : index
    %56 = vector.load %arg12[%c0_28, %c0_29] : memref<1x32xf32, #tpu.memory_space<vmem>>, vector<1x32xf32>
    %57 = vector.broadcast %56 : vector<1x32xf32> to vector<8x32xf32>
    %58 = arith.addf %55, %57 : vector<8x32xf32>
    %59 = math.tanh %58 : vector<8x32xf32>
    %60 = arith.index_cast %c0_i32_2 : i32 to index
    %c0_30 = arith.constant 0 : index
    %c0_31 = arith.constant 0 : index
    %61 = vector.load %arg5[%60, %c0_30, %c0_31] : memref<8x1x1xf32, #tpu.memory_space<vmem>>, vector<1x1x1xf32>
    %62 = vector.shape_cast %61 : vector<1x1x1xf32> to vector<1x1xf32>
    %63 = vector.broadcast %62 : vector<1x1xf32> to vector<8x32xf32>
    %64 = arith.mulf %59, %63 : vector<8x32xf32>
    %65 = arith.addf %3, %64 : vector<8x32xf32>
    %66 = arith.index_cast %c0_i32_2 : i32 to index
    %c0_32 = arith.constant 0 : index
    %c0_33 = arith.constant 0 : index
    %67 = vector.load %arg3[%66, %c0_32, %c0_33] : memref<8x8x32xbf16, #tpu.memory_space<vmem>>, vector<1x8x32xbf16>
    %68 = vector.shape_cast %67 : vector<1x8x32xbf16> to vector<8x32xbf16>
    %69 = arith.extf %68 : vector<8x32xbf16> to vector<8x32xf32>
    %70 = arith.mulf %24, %69 : vector<8x32xf32>
    %71 = arith.addf %65, %70 : vector<8x32xf32>
    %c1_i32 = arith.constant 1 : i32
    %72 = arith.truncf %71 : vector<8x32xf32> to vector<8x32xbf16>
    %73 = arith.index_cast %c1_i32 : i32 to index
    %c0_34 = arith.constant 0 : index
    %c0_35 = arith.constant 0 : index
    %74 = vector.load %arg4[%73, %c0_34, %c0_35] : memref<8x1x64xf32, #tpu.memory_space<vmem>>, vector<1x1x64xf32>
    %75 = vector.shape_cast %74 : vector<1x1x64xf32> to vector<1x64xf32>
    %c0_36 = arith.constant 0 : index
    %c0_37 = arith.constant 0 : index
    %76 = vector.load %arg8[%c0_36, %c0_37] : memref<32x64xbf16, #tpu.memory_space<vmem>>, vector<32x32xbf16>
    %cst_38 = arith.constant dense<0.000000e+00> : vector<8x32xf32>
    %77 = tpu.matmul %72, %76, %cst_38 {dimension_numbers = #tpu.dot_dimension_numbers<[1], [0], [0], [1], [0, 0, 1, 1], [], []>} : vector<8x32xbf16>, vector<32x32xbf16>, vector<8x32xf32> -> vector<8x32xf32>
    %78 = vector.extract_strided_slice %75 {offsets = [0, 0], sizes = [1, 32], strides = [1, 1]} : vector<1x64xf32> to vector<1x32xf32>
    %79 = vector.broadcast %78 : vector<1x32xf32> to vector<8x32xf32>
    %80 = arith.addf %77, %79 : vector<8x32xf32>
    %c0_39 = arith.constant 0 : index
    %c32_40 = arith.constant 32 : index
    %81 = vector.load %arg8[%c0_39, %c32_40] : memref<32x64xbf16, #tpu.memory_space<vmem>>, vector<32x32xbf16>
    %cst_41 = arith.constant dense<0.000000e+00> : vector<8x32xf32>
    %82 = tpu.matmul %72, %81, %cst_41 {dimension_numbers = #tpu.dot_dimension_numbers<[1], [0], [0], [1], [0, 0, 1, 1], [], []>} : vector<8x32xbf16>, vector<32x32xbf16>, vector<8x32xf32> -> vector<8x32xf32>
    %83 = vector.extract_strided_slice %75 {offsets = [0, 32], sizes = [1, 32], strides = [1, 1]} : vector<1x64xf32> to vector<1x32xf32>
    %84 = vector.broadcast %83 : vector<1x32xf32> to vector<8x32xf32>
    %85 = arith.addf %82, %84 : vector<8x32xf32>
    %86 = arith.negf %80 : vector<8x32xf32>
    %87 = math.exp %86 : vector<8x32xf32>
    %cst_42 = arith.constant 1.000000e+00 : f32
    %88 = vector.broadcast %cst_42 : f32 to vector<8x32xf32>
    %89 = arith.addf %88, %87 : vector<8x32xf32>
    %90 = arith.divf %88, %89 : vector<8x32xf32>
    %91 = arith.mulf %80, %90 : vector<8x32xf32>
    %92 = math.tanh %85 : vector<8x32xf32>
    %93 = arith.truncf %91 : vector<8x32xf32> to vector<8x32xbf16>
    %c0_43 = arith.constant 0 : index
    %c0_44 = arith.constant 0 : index
    %c0_45 = arith.constant 0 : index
    %94 = vector.load %arg9[%c0_43, %c0_44, %c0_45] : memref<2x32x32xbf16, #tpu.memory_space<vmem>>, vector<1x32x32xbf16>
    %95 = vector.shape_cast %94 : vector<1x32x32xbf16> to vector<32x32xbf16>
    %cst_46 = arith.constant dense<0.000000e+00> : vector<8x32xf32>
    %96 = tpu.matmul %93, %95, %cst_46 {dimension_numbers = #tpu.dot_dimension_numbers<[1], [0], [0], [1], [0, 0, 1, 1], [], []>} : vector<8x32xbf16>, vector<32x32xbf16>, vector<8x32xf32> -> vector<8x32xf32>
    %c0_47 = arith.constant 0 : index
    %c0_48 = arith.constant 0 : index
    %c0_49 = arith.constant 0 : index
    %97 = vector.load %arg10[%c0_47, %c0_48, %c0_49] : memref<2x1x32xf32, #tpu.memory_space<vmem>>, vector<1x1x32xf32>
    %98 = vector.shape_cast %97 : vector<1x1x32xf32> to vector<1x32xf32>
    %99 = vector.broadcast %98 : vector<1x32xf32> to vector<8x32xf32>
    %100 = arith.addf %96, %99 : vector<8x32xf32>
    %101 = arith.negf %100 : vector<8x32xf32>
    %102 = math.exp %101 : vector<8x32xf32>
    %cst_50 = arith.constant 1.000000e+00 : f32
    %103 = vector.broadcast %cst_50 : f32 to vector<8x32xf32>
    %104 = arith.addf %103, %102 : vector<8x32xf32>
    %105 = arith.divf %103, %104 : vector<8x32xf32>
    %106 = arith.mulf %100, %105 : vector<8x32xf32>
    %107 = arith.truncf %106 : vector<8x32xf32> to vector<8x32xbf16>
    %c1_51 = arith.constant 1 : index
    %c0_52 = arith.constant 0 : index
    %c0_53 = arith.constant 0 : index
    %108 = vector.load %arg9[%c1_51, %c0_52, %c0_53] : memref<2x32x32xbf16, #tpu.memory_space<vmem>>, vector<1x32x32xbf16>
    %109 = vector.shape_cast %108 : vector<1x32x32xbf16> to vector<32x32xbf16>
    %cst_54 = arith.constant dense<0.000000e+00> : vector<8x32xf32>
    %110 = tpu.matmul %107, %109, %cst_54 {dimension_numbers = #tpu.dot_dimension_numbers<[1], [0], [0], [1], [0, 0, 1, 1], [], []>} : vector<8x32xbf16>, vector<32x32xbf16>, vector<8x32xf32> -> vector<8x32xf32>
    %c1_55 = arith.constant 1 : index
    %c0_56 = arith.constant 0 : index
    %c0_57 = arith.constant 0 : index
    %111 = vector.load %arg10[%c1_55, %c0_56, %c0_57] : memref<2x1x32xf32, #tpu.memory_space<vmem>>, vector<1x1x32xf32>
    %112 = vector.shape_cast %111 : vector<1x1x32xf32> to vector<1x32xf32>
    %113 = vector.broadcast %112 : vector<1x32xf32> to vector<8x32xf32>
    %114 = arith.addf %110, %113 : vector<8x32xf32>
    %115 = arith.negf %114 : vector<8x32xf32>
    %116 = math.exp %115 : vector<8x32xf32>
    %cst_58 = arith.constant 1.000000e+00 : f32
    %117 = vector.broadcast %cst_58 : f32 to vector<8x32xf32>
    %118 = arith.addf %117, %116 : vector<8x32xf32>
    %119 = arith.divf %117, %118 : vector<8x32xf32>
    %120 = arith.mulf %114, %119 : vector<8x32xf32>
    %121 = arith.truncf %120 : vector<8x32xf32> to vector<8x32xbf16>
    %c0_59 = arith.constant 0 : index
    %c0_60 = arith.constant 0 : index
    %122 = vector.load %arg11[%c0_59, %c0_60] : memref<32x32xbf16, #tpu.memory_space<vmem>>, vector<32x32xbf16>
    %cst_61 = arith.constant dense<0.000000e+00> : vector<8x32xf32>
    %123 = tpu.matmul %121, %122, %cst_61 {dimension_numbers = #tpu.dot_dimension_numbers<[1], [0], [0], [1], [0, 0, 1, 1], [], []>} : vector<8x32xbf16>, vector<32x32xbf16>, vector<8x32xf32> -> vector<8x32xf32>
    %c0_62 = arith.constant 0 : index
    %c0_63 = arith.constant 0 : index
    %124 = vector.load %arg12[%c0_62, %c0_63] : memref<1x32xf32, #tpu.memory_space<vmem>>, vector<1x32xf32>
    %125 = vector.broadcast %124 : vector<1x32xf32> to vector<8x32xf32>
    %126 = arith.addf %123, %125 : vector<8x32xf32>
    %127 = math.tanh %126 : vector<8x32xf32>
    %128 = arith.index_cast %c1_i32 : i32 to index
    %c0_64 = arith.constant 0 : index
    %c0_65 = arith.constant 0 : index
    %129 = vector.load %arg5[%128, %c0_64, %c0_65] : memref<8x1x1xf32, #tpu.memory_space<vmem>>, vector<1x1x1xf32>
    %130 = vector.shape_cast %129 : vector<1x1x1xf32> to vector<1x1xf32>
    %131 = vector.broadcast %130 : vector<1x1xf32> to vector<8x32xf32>
    %132 = arith.mulf %127, %131 : vector<8x32xf32>
    %133 = arith.addf %71, %132 : vector<8x32xf32>
    %134 = arith.index_cast %c1_i32 : i32 to index
    %c0_66 = arith.constant 0 : index
    %c0_67 = arith.constant 0 : index
    %135 = vector.load %arg3[%134, %c0_66, %c0_67] : memref<8x8x32xbf16, #tpu.memory_space<vmem>>, vector<1x8x32xbf16>
    %136 = vector.shape_cast %135 : vector<1x8x32xbf16> to vector<8x32xbf16>
    %137 = arith.extf %136 : vector<8x32xbf16> to vector<8x32xf32>
    %138 = arith.mulf %92, %137 : vector<8x32xf32>
    %139 = arith.addf %133, %138 : vector<8x32xf32>
    %c2_i32 = arith.constant 2 : i32
    %140 = arith.truncf %139 : vector<8x32xf32> to vector<8x32xbf16>
    %141 = arith.index_cast %c2_i32 : i32 to index
    %c0_68 = arith.constant 0 : index
    %c0_69 = arith.constant 0 : index
    %142 = vector.load %arg4[%141, %c0_68, %c0_69] : memref<8x1x64xf32, #tpu.memory_space<vmem>>, vector<1x1x64xf32>
    %143 = vector.shape_cast %142 : vector<1x1x64xf32> to vector<1x64xf32>
    %c0_70 = arith.constant 0 : index
    %c0_71 = arith.constant 0 : index
    %144 = vector.load %arg8[%c0_70, %c0_71] : memref<32x64xbf16, #tpu.memory_space<vmem>>, vector<32x32xbf16>
    %cst_72 = arith.constant dense<0.000000e+00> : vector<8x32xf32>
    %145 = tpu.matmul %140, %144, %cst_72 {dimension_numbers = #tpu.dot_dimension_numbers<[1], [0], [0], [1], [0, 0, 1, 1], [], []>} : vector<8x32xbf16>, vector<32x32xbf16>, vector<8x32xf32> -> vector<8x32xf32>
    %146 = vector.extract_strided_slice %143 {offsets = [0, 0], sizes = [1, 32], strides = [1, 1]} : vector<1x64xf32> to vector<1x32xf32>
    %147 = vector.broadcast %146 : vector<1x32xf32> to vector<8x32xf32>
    %148 = arith.addf %145, %147 : vector<8x32xf32>
    %c0_73 = arith.constant 0 : index
    %c32_74 = arith.constant 32 : index
    %149 = vector.load %arg8[%c0_73, %c32_74] : memref<32x64xbf16, #tpu.memory_space<vmem>>, vector<32x32xbf16>
    %cst_75 = arith.constant dense<0.000000e+00> : vector<8x32xf32>
    %150 = tpu.matmul %140, %149, %cst_75 {dimension_numbers = #tpu.dot_dimension_numbers<[1], [0], [0], [1], [0, 0, 1, 1], [], []>} : vector<8x32xbf16>, vector<32x32xbf16>, vector<8x32xf32> -> vector<8x32xf32>
    %151 = vector.extract_strided_slice %143 {offsets = [0, 32], sizes = [1, 32], strides = [1, 1]} : vector<1x64xf32> to vector<1x32xf32>
    %152 = vector.broadcast %151 : vector<1x32xf32> to vector<8x32xf32>
    %153 = arith.addf %150, %152 : vector<8x32xf32>
    %154 = arith.negf %148 : vector<8x32xf32>
    %155 = math.exp %154 : vector<8x32xf32>
    %cst_76 = arith.constant 1.000000e+00 : f32
    %156 = vector.broadcast %cst_76 : f32 to vector<8x32xf32>
    %157 = arith.addf %156, %155 : vector<8x32xf32>
    %158 = arith.divf %156, %157 : vector<8x32xf32>
    %159 = arith.mulf %148, %158 : vector<8x32xf32>
    %160 = math.tanh %153 : vector<8x32xf32>
    %161 = arith.truncf %159 : vector<8x32xf32> to vector<8x32xbf16>
    %c0_77 = arith.constant 0 : index
    %c0_78 = arith.constant 0 : index
    %c0_79 = arith.constant 0 : index
    %162 = vector.load %arg9[%c0_77, %c0_78, %c0_79] : memref<2x32x32xbf16, #tpu.memory_space<vmem>>, vector<1x32x32xbf16>
    %163 = vector.shape_cast %162 : vector<1x32x32xbf16> to vector<32x32xbf16>
    %cst_80 = arith.constant dense<0.000000e+00> : vector<8x32xf32>
    %164 = tpu.matmul %161, %163, %cst_80 {dimension_numbers = #tpu.dot_dimension_numbers<[1], [0], [0], [1], [0, 0, 1, 1], [], []>} : vector<8x32xbf16>, vector<32x32xbf16>, vector<8x32xf32> -> vector<8x32xf32>
    %c0_81 = arith.constant 0 : index
    %c0_82 = arith.constant 0 : index
    %c0_83 = arith.constant 0 : index
    %165 = vector.load %arg10[%c0_81, %c0_82, %c0_83] : memref<2x1x32xf32, #tpu.memory_space<vmem>>, vector<1x1x32xf32>
    %166 = vector.shape_cast %165 : vector<1x1x32xf32> to vector<1x32xf32>
    %167 = vector.broadcast %166 : vector<1x32xf32> to vector<8x32xf32>
    %168 = arith.addf %164, %167 : vector<8x32xf32>
    %169 = arith.negf %168 : vector<8x32xf32>
    %170 = math.exp %169 : vector<8x32xf32>
    %cst_84 = arith.constant 1.000000e+00 : f32
    %171 = vector.broadcast %cst_84 : f32 to vector<8x32xf32>
    %172 = arith.addf %171, %170 : vector<8x32xf32>
    %173 = arith.divf %171, %172 : vector<8x32xf32>
    %174 = arith.mulf %168, %173 : vector<8x32xf32>
    %175 = arith.truncf %174 : vector<8x32xf32> to vector<8x32xbf16>
    %c1_85 = arith.constant 1 : index
    %c0_86 = arith.constant 0 : index
    %c0_87 = arith.constant 0 : index
    %176 = vector.load %arg9[%c1_85, %c0_86, %c0_87] : memref<2x32x32xbf16, #tpu.memory_space<vmem>>, vector<1x32x32xbf16>
    %177 = vector.shape_cast %176 : vector<1x32x32xbf16> to vector<32x32xbf16>
    %cst_88 = arith.constant dense<0.000000e+00> : vector<8x32xf32>
    %178 = tpu.matmul %175, %177, %cst_88 {dimension_numbers = #tpu.dot_dimension_numbers<[1], [0], [0], [1], [0, 0, 1, 1], [], []>} : vector<8x32xbf16>, vector<32x32xbf16>, vector<8x32xf32> -> vector<8x32xf32>
    %c1_89 = arith.constant 1 : index
    %c0_90 = arith.constant 0 : index
    %c0_91 = arith.constant 0 : index
    %179 = vector.load %arg10[%c1_89, %c0_90, %c0_91] : memref<2x1x32xf32, #tpu.memory_space<vmem>>, vector<1x1x32xf32>
    %180 = vector.shape_cast %179 : vector<1x1x32xf32> to vector<1x32xf32>
    %181 = vector.broadcast %180 : vector<1x32xf32> to vector<8x32xf32>
    %182 = arith.addf %178, %181 : vector<8x32xf32>
    %183 = arith.negf %182 : vector<8x32xf32>
    %184 = math.exp %183 : vector<8x32xf32>
    %cst_92 = arith.constant 1.000000e+00 : f32
    %185 = vector.broadcast %cst_92 : f32 to vector<8x32xf32>
    %186 = arith.addf %185, %184 : vector<8x32xf32>
    %187 = arith.divf %185, %186 : vector<8x32xf32>
    %188 = arith.mulf %182, %187 : vector<8x32xf32>
    %189 = arith.truncf %188 : vector<8x32xf32> to vector<8x32xbf16>
    %c0_93 = arith.constant 0 : index
    %c0_94 = arith.constant 0 : index
    %190 = vector.load %arg11[%c0_93, %c0_94] : memref<32x32xbf16, #tpu.memory_space<vmem>>, vector<32x32xbf16>
    %cst_95 = arith.constant dense<0.000000e+00> : vector<8x32xf32>
    %191 = tpu.matmul %189, %190, %cst_95 {dimension_numbers = #tpu.dot_dimension_numbers<[1], [0], [0], [1], [0, 0, 1, 1], [], []>} : vector<8x32xbf16>, vector<32x32xbf16>, vector<8x32xf32> -> vector<8x32xf32>
    %c0_96 = arith.constant 0 : index
    %c0_97 = arith.constant 0 : index
    %192 = vector.load %arg12[%c0_96, %c0_97] : memref<1x32xf32, #tpu.memory_space<vmem>>, vector<1x32xf32>
    %193 = vector.broadcast %192 : vector<1x32xf32> to vector<8x32xf32>
    %194 = arith.addf %191, %193 : vector<8x32xf32>
    %195 = math.tanh %194 : vector<8x32xf32>
    %196 = arith.index_cast %c2_i32 : i32 to index
    %c0_98 = arith.constant 0 : index
    %c0_99 = arith.constant 0 : index
    %197 = vector.load %arg5[%196, %c0_98, %c0_99] : memref<8x1x1xf32, #tpu.memory_space<vmem>>, vector<1x1x1xf32>
    %198 = vector.shape_cast %197 : vector<1x1x1xf32> to vector<1x1xf32>
    %199 = vector.broadcast %198 : vector<1x1xf32> to vector<8x32xf32>
    %200 = arith.mulf %195, %199 : vector<8x32xf32>
    %201 = arith.addf %139, %200 : vector<8x32xf32>
    %202 = arith.index_cast %c2_i32 : i32 to index
    %c0_100 = arith.constant 0 : index
    %c0_101 = arith.constant 0 : index
    %203 = vector.load %arg3[%202, %c0_100, %c0_101] : memref<8x8x32xbf16, #tpu.memory_space<vmem>>, vector<1x8x32xbf16>
    %204 = vector.shape_cast %203 : vector<1x8x32xbf16> to vector<8x32xbf16>
    %205 = arith.extf %204 : vector<8x32xbf16> to vector<8x32xf32>
    %206 = arith.mulf %160, %205 : vector<8x32xf32>
    %207 = arith.addf %201, %206 : vector<8x32xf32>
    %c3_i32 = arith.constant 3 : i32
    %208 = arith.truncf %207 : vector<8x32xf32> to vector<8x32xbf16>
    %209 = arith.index_cast %c3_i32 : i32 to index
    %c0_102 = arith.constant 0 : index
    %c0_103 = arith.constant 0 : index
    %210 = vector.load %arg4[%209, %c0_102, %c0_103] : memref<8x1x64xf32, #tpu.memory_space<vmem>>, vector<1x1x64xf32>
    %211 = vector.shape_cast %210 : vector<1x1x64xf32> to vector<1x64xf32>
    %c0_104 = arith.constant 0 : index
    %c0_105 = arith.constant 0 : index
    %212 = vector.load %arg8[%c0_104, %c0_105] : memref<32x64xbf16, #tpu.memory_space<vmem>>, vector<32x32xbf16>
    %cst_106 = arith.constant dense<0.000000e+00> : vector<8x32xf32>
    %213 = tpu.matmul %208, %212, %cst_106 {dimension_numbers = #tpu.dot_dimension_numbers<[1], [0], [0], [1], [0, 0, 1, 1], [], []>} : vector<8x32xbf16>, vector<32x32xbf16>, vector<8x32xf32> -> vector<8x32xf32>
    %214 = vector.extract_strided_slice %211 {offsets = [0, 0], sizes = [1, 32], strides = [1, 1]} : vector<1x64xf32> to vector<1x32xf32>
    %215 = vector.broadcast %214 : vector<1x32xf32> to vector<8x32xf32>
    %216 = arith.addf %213, %215 : vector<8x32xf32>
    %c0_107 = arith.constant 0 : index
    %c32_108 = arith.constant 32 : index
    %217 = vector.load %arg8[%c0_107, %c32_108] : memref<32x64xbf16, #tpu.memory_space<vmem>>, vector<32x32xbf16>
    %cst_109 = arith.constant dense<0.000000e+00> : vector<8x32xf32>
    %218 = tpu.matmul %208, %217, %cst_109 {dimension_numbers = #tpu.dot_dimension_numbers<[1], [0], [0], [1], [0, 0, 1, 1], [], []>} : vector<8x32xbf16>, vector<32x32xbf16>, vector<8x32xf32> -> vector<8x32xf32>
    %219 = vector.extract_strided_slice %211 {offsets = [0, 32], sizes = [1, 32], strides = [1, 1]} : vector<1x64xf32> to vector<1x32xf32>
    %220 = vector.broadcast %219 : vector<1x32xf32> to vector<8x32xf32>
    %221 = arith.addf %218, %220 : vector<8x32xf32>
    %222 = arith.negf %216 : vector<8x32xf32>
    %223 = math.exp %222 : vector<8x32xf32>
    %cst_110 = arith.constant 1.000000e+00 : f32
    %224 = vector.broadcast %cst_110 : f32 to vector<8x32xf32>
    %225 = arith.addf %224, %223 : vector<8x32xf32>
    %226 = arith.divf %224, %225 : vector<8x32xf32>
    %227 = arith.mulf %216, %226 : vector<8x32xf32>
    %228 = math.tanh %221 : vector<8x32xf32>
    %229 = arith.truncf %227 : vector<8x32xf32> to vector<8x32xbf16>
    %c0_111 = arith.constant 0 : index
    %c0_112 = arith.constant 0 : index
    %c0_113 = arith.constant 0 : index
    %230 = vector.load %arg9[%c0_111, %c0_112, %c0_113] : memref<2x32x32xbf16, #tpu.memory_space<vmem>>, vector<1x32x32xbf16>
    %231 = vector.shape_cast %230 : vector<1x32x32xbf16> to vector<32x32xbf16>
    %cst_114 = arith.constant dense<0.000000e+00> : vector<8x32xf32>
    %232 = tpu.matmul %229, %231, %cst_114 {dimension_numbers = #tpu.dot_dimension_numbers<[1], [0], [0], [1], [0, 0, 1, 1], [], []>} : vector<8x32xbf16>, vector<32x32xbf16>, vector<8x32xf32> -> vector<8x32xf32>
    %c0_115 = arith.constant 0 : index
    %c0_116 = arith.constant 0 : index
    %c0_117 = arith.constant 0 : index
    %233 = vector.load %arg10[%c0_115, %c0_116, %c0_117] : memref<2x1x32xf32, #tpu.memory_space<vmem>>, vector<1x1x32xf32>
    %234 = vector.shape_cast %233 : vector<1x1x32xf32> to vector<1x32xf32>
    %235 = vector.broadcast %234 : vector<1x32xf32> to vector<8x32xf32>
    %236 = arith.addf %232, %235 : vector<8x32xf32>
    %237 = arith.negf %236 : vector<8x32xf32>
    %238 = math.exp %237 : vector<8x32xf32>
    %cst_118 = arith.constant 1.000000e+00 : f32
    %239 = vector.broadcast %cst_118 : f32 to vector<8x32xf32>
    %240 = arith.addf %239, %238 : vector<8x32xf32>
    %241 = arith.divf %239, %240 : vector<8x32xf32>
    %242 = arith.mulf %236, %241 : vector<8x32xf32>
    %243 = arith.truncf %242 : vector<8x32xf32> to vector<8x32xbf16>
    %c1_119 = arith.constant 1 : index
    %c0_120 = arith.constant 0 : index
    %c0_121 = arith.constant 0 : index
    %244 = vector.load %arg9[%c1_119, %c0_120, %c0_121] : memref<2x32x32xbf16, #tpu.memory_space<vmem>>, vector<1x32x32xbf16>
    %245 = vector.shape_cast %244 : vector<1x32x32xbf16> to vector<32x32xbf16>
    %cst_122 = arith.constant dense<0.000000e+00> : vector<8x32xf32>
    %246 = tpu.matmul %243, %245, %cst_122 {dimension_numbers = #tpu.dot_dimension_numbers<[1], [0], [0], [1], [0, 0, 1, 1], [], []>} : vector<8x32xbf16>, vector<32x32xbf16>, vector<8x32xf32> -> vector<8x32xf32>
    %c1_123 = arith.constant 1 : index
    %c0_124 = arith.constant 0 : index
    %c0_125 = arith.constant 0 : index
    %247 = vector.load %arg10[%c1_123, %c0_124, %c0_125] : memref<2x1x32xf32, #tpu.memory_space<vmem>>, vector<1x1x32xf32>
    %248 = vector.shape_cast %247 : vector<1x1x32xf32> to vector<1x32xf32>
    %249 = vector.broadcast %248 : vector<1x32xf32> to vector<8x32xf32>
    %250 = arith.addf %246, %249 : vector<8x32xf32>
    %251 = arith.negf %250 : vector<8x32xf32>
    %252 = math.exp %251 : vector<8x32xf32>
    %cst_126 = arith.constant 1.000000e+00 : f32
    %253 = vector.broadcast %cst_126 : f32 to vector<8x32xf32>
    %254 = arith.addf %253, %252 : vector<8x32xf32>
    %255 = arith.divf %253, %254 : vector<8x32xf32>
    %256 = arith.mulf %250, %255 : vector<8x32xf32>
    %257 = arith.truncf %256 : vector<8x32xf32> to vector<8x32xbf16>
    %c0_127 = arith.constant 0 : index
    %c0_128 = arith.constant 0 : index
    %258 = vector.load %arg11[%c0_127, %c0_128] : memref<32x32xbf16, #tpu.memory_space<vmem>>, vector<32x32xbf16>
    %cst_129 = arith.constant dense<0.000000e+00> : vector<8x32xf32>
    %259 = tpu.matmul %257, %258, %cst_129 {dimension_numbers = #tpu.dot_dimension_numbers<[1], [0], [0], [1], [0, 0, 1, 1], [], []>} : vector<8x32xbf16>, vector<32x32xbf16>, vector<8x32xf32> -> vector<8x32xf32>
    %c0_130 = arith.constant 0 : index
    %c0_131 = arith.constant 0 : index
    %260 = vector.load %arg12[%c0_130, %c0_131] : memref<1x32xf32, #tpu.memory_space<vmem>>, vector<1x32xf32>
    %261 = vector.broadcast %260 : vector<1x32xf32> to vector<8x32xf32>
    %262 = arith.addf %259, %261 : vector<8x32xf32>
    %263 = math.tanh %262 : vector<8x32xf32>
    %264 = arith.index_cast %c3_i32 : i32 to index
    %c0_132 = arith.constant 0 : index
    %c0_133 = arith.constant 0 : index
    %265 = vector.load %arg5[%264, %c0_132, %c0_133] : memref<8x1x1xf32, #tpu.memory_space<vmem>>, vector<1x1x1xf32>
    %266 = vector.shape_cast %265 : vector<1x1x1xf32> to vector<1x1xf32>
    %267 = vector.broadcast %266 : vector<1x1xf32> to vector<8x32xf32>
    %268 = arith.mulf %263, %267 : vector<8x32xf32>
    %269 = arith.addf %207, %268 : vector<8x32xf32>
    %270 = arith.index_cast %c3_i32 : i32 to index
    %c0_134 = arith.constant 0 : index
    %c0_135 = arith.constant 0 : index
    %271 = vector.load %arg3[%270, %c0_134, %c0_135] : memref<8x8x32xbf16, #tpu.memory_space<vmem>>, vector<1x8x32xbf16>
    %272 = vector.shape_cast %271 : vector<1x8x32xbf16> to vector<8x32xbf16>
    %273 = arith.extf %272 : vector<8x32xbf16> to vector<8x32xf32>
    %274 = arith.mulf %228, %273 : vector<8x32xf32>
    %275 = arith.addf %269, %274 : vector<8x32xf32>
    %c4_i32 = arith.constant 4 : i32
    %276 = arith.truncf %275 : vector<8x32xf32> to vector<8x32xbf16>
    %277 = arith.index_cast %c4_i32 : i32 to index
    %c0_136 = arith.constant 0 : index
    %c0_137 = arith.constant 0 : index
    %278 = vector.load %arg4[%277, %c0_136, %c0_137] : memref<8x1x64xf32, #tpu.memory_space<vmem>>, vector<1x1x64xf32>
    %279 = vector.shape_cast %278 : vector<1x1x64xf32> to vector<1x64xf32>
    %c0_138 = arith.constant 0 : index
    %c0_139 = arith.constant 0 : index
    %280 = vector.load %arg8[%c0_138, %c0_139] : memref<32x64xbf16, #tpu.memory_space<vmem>>, vector<32x32xbf16>
    %cst_140 = arith.constant dense<0.000000e+00> : vector<8x32xf32>
    %281 = tpu.matmul %276, %280, %cst_140 {dimension_numbers = #tpu.dot_dimension_numbers<[1], [0], [0], [1], [0, 0, 1, 1], [], []>} : vector<8x32xbf16>, vector<32x32xbf16>, vector<8x32xf32> -> vector<8x32xf32>
    %282 = vector.extract_strided_slice %279 {offsets = [0, 0], sizes = [1, 32], strides = [1, 1]} : vector<1x64xf32> to vector<1x32xf32>
    %283 = vector.broadcast %282 : vector<1x32xf32> to vector<8x32xf32>
    %284 = arith.addf %281, %283 : vector<8x32xf32>
    %c0_141 = arith.constant 0 : index
    %c32_142 = arith.constant 32 : index
    %285 = vector.load %arg8[%c0_141, %c32_142] : memref<32x64xbf16, #tpu.memory_space<vmem>>, vector<32x32xbf16>
    %cst_143 = arith.constant dense<0.000000e+00> : vector<8x32xf32>
    %286 = tpu.matmul %276, %285, %cst_143 {dimension_numbers = #tpu.dot_dimension_numbers<[1], [0], [0], [1], [0, 0, 1, 1], [], []>} : vector<8x32xbf16>, vector<32x32xbf16>, vector<8x32xf32> -> vector<8x32xf32>
    %287 = vector.extract_strided_slice %279 {offsets = [0, 32], sizes = [1, 32], strides = [1, 1]} : vector<1x64xf32> to vector<1x32xf32>
    %288 = vector.broadcast %287 : vector<1x32xf32> to vector<8x32xf32>
    %289 = arith.addf %286, %288 : vector<8x32xf32>
    %290 = arith.negf %284 : vector<8x32xf32>
    %291 = math.exp %290 : vector<8x32xf32>
    %cst_144 = arith.constant 1.000000e+00 : f32
    %292 = vector.broadcast %cst_144 : f32 to vector<8x32xf32>
    %293 = arith.addf %292, %291 : vector<8x32xf32>
    %294 = arith.divf %292, %293 : vector<8x32xf32>
    %295 = arith.mulf %284, %294 : vector<8x32xf32>
    %296 = math.tanh %289 : vector<8x32xf32>
    %297 = arith.truncf %295 : vector<8x32xf32> to vector<8x32xbf16>
    %c0_145 = arith.constant 0 : index
    %c0_146 = arith.constant 0 : index
    %c0_147 = arith.constant 0 : index
    %298 = vector.load %arg9[%c0_145, %c0_146, %c0_147] : memref<2x32x32xbf16, #tpu.memory_space<vmem>>, vector<1x32x32xbf16>
    %299 = vector.shape_cast %298 : vector<1x32x32xbf16> to vector<32x32xbf16>
    %cst_148 = arith.constant dense<0.000000e+00> : vector<8x32xf32>
    %300 = tpu.matmul %297, %299, %cst_148 {dimension_numbers = #tpu.dot_dimension_numbers<[1], [0], [0], [1], [0, 0, 1, 1], [], []>} : vector<8x32xbf16>, vector<32x32xbf16>, vector<8x32xf32> -> vector<8x32xf32>
    %c0_149 = arith.constant 0 : index
    %c0_150 = arith.constant 0 : index
    %c0_151 = arith.constant 0 : index
    %301 = vector.load %arg10[%c0_149, %c0_150, %c0_151] : memref<2x1x32xf32, #tpu.memory_space<vmem>>, vector<1x1x32xf32>
    %302 = vector.shape_cast %301 : vector<1x1x32xf32> to vector<1x32xf32>
    %303 = vector.broadcast %302 : vector<1x32xf32> to vector<8x32xf32>
    %304 = arith.addf %300, %303 : vector<8x32xf32>
    %305 = arith.negf %304 : vector<8x32xf32>
    %306 = math.exp %305 : vector<8x32xf32>
    %cst_152 = arith.constant 1.000000e+00 : f32
    %307 = vector.broadcast %cst_152 : f32 to vector<8x32xf32>
    %308 = arith.addf %307, %306 : vector<8x32xf32>
    %309 = arith.divf %307, %308 : vector<8x32xf32>
    %310 = arith.mulf %304, %309 : vector<8x32xf32>
    %311 = arith.truncf %310 : vector<8x32xf32> to vector<8x32xbf16>
    %c1_153 = arith.constant 1 : index
    %c0_154 = arith.constant 0 : index
    %c0_155 = arith.constant 0 : index
    %312 = vector.load %arg9[%c1_153, %c0_154, %c0_155] : memref<2x32x32xbf16, #tpu.memory_space<vmem>>, vector<1x32x32xbf16>
    %313 = vector.shape_cast %312 : vector<1x32x32xbf16> to vector<32x32xbf16>
    %cst_156 = arith.constant dense<0.000000e+00> : vector<8x32xf32>
    %314 = tpu.matmul %311, %313, %cst_156 {dimension_numbers = #tpu.dot_dimension_numbers<[1], [0], [0], [1], [0, 0, 1, 1], [], []>} : vector<8x32xbf16>, vector<32x32xbf16>, vector<8x32xf32> -> vector<8x32xf32>
    %c1_157 = arith.constant 1 : index
    %c0_158 = arith.constant 0 : index
    %c0_159 = arith.constant 0 : index
    %315 = vector.load %arg10[%c1_157, %c0_158, %c0_159] : memref<2x1x32xf32, #tpu.memory_space<vmem>>, vector<1x1x32xf32>
    %316 = vector.shape_cast %315 : vector<1x1x32xf32> to vector<1x32xf32>
    %317 = vector.broadcast %316 : vector<1x32xf32> to vector<8x32xf32>
    %318 = arith.addf %314, %317 : vector<8x32xf32>
    %319 = arith.negf %318 : vector<8x32xf32>
    %320 = math.exp %319 : vector<8x32xf32>
    %cst_160 = arith.constant 1.000000e+00 : f32
    %321 = vector.broadcast %cst_160 : f32 to vector<8x32xf32>
    %322 = arith.addf %321, %320 : vector<8x32xf32>
    %323 = arith.divf %321, %322 : vector<8x32xf32>
    %324 = arith.mulf %318, %323 : vector<8x32xf32>
    %325 = arith.truncf %324 : vector<8x32xf32> to vector<8x32xbf16>
    %c0_161 = arith.constant 0 : index
    %c0_162 = arith.constant 0 : index
    %326 = vector.load %arg11[%c0_161, %c0_162] : memref<32x32xbf16, #tpu.memory_space<vmem>>, vector<32x32xbf16>
    %cst_163 = arith.constant dense<0.000000e+00> : vector<8x32xf32>
    %327 = tpu.matmul %325, %326, %cst_163 {dimension_numbers = #tpu.dot_dimension_numbers<[1], [0], [0], [1], [0, 0, 1, 1], [], []>} : vector<8x32xbf16>, vector<32x32xbf16>, vector<8x32xf32> -> vector<8x32xf32>
    %c0_164 = arith.constant 0 : index
    %c0_165 = arith.constant 0 : index
    %328 = vector.load %arg12[%c0_164, %c0_165] : memref<1x32xf32, #tpu.memory_space<vmem>>, vector<1x32xf32>
    %329 = vector.broadcast %328 : vector<1x32xf32> to vector<8x32xf32>
    %330 = arith.addf %327, %329 : vector<8x32xf32>
    %331 = math.tanh %330 : vector<8x32xf32>
    %332 = arith.index_cast %c4_i32 : i32 to index
    %c0_166 = arith.constant 0 : index
    %c0_167 = arith.constant 0 : index
    %333 = vector.load %arg5[%332, %c0_166, %c0_167] : memref<8x1x1xf32, #tpu.memory_space<vmem>>, vector<1x1x1xf32>
    %334 = vector.shape_cast %333 : vector<1x1x1xf32> to vector<1x1xf32>
    %335 = vector.broadcast %334 : vector<1x1xf32> to vector<8x32xf32>
    %336 = arith.mulf %331, %335 : vector<8x32xf32>
    %337 = arith.addf %275, %336 : vector<8x32xf32>
    %338 = arith.index_cast %c4_i32 : i32 to index
    %c0_168 = arith.constant 0 : index
    %c0_169 = arith.constant 0 : index
    %339 = vector.load %arg3[%338, %c0_168, %c0_169] : memref<8x8x32xbf16, #tpu.memory_space<vmem>>, vector<1x8x32xbf16>
    %340 = vector.shape_cast %339 : vector<1x8x32xbf16> to vector<8x32xbf16>
    %341 = arith.extf %340 : vector<8x32xbf16> to vector<8x32xf32>
    %342 = arith.mulf %296, %341 : vector<8x32xf32>
    %343 = arith.addf %337, %342 : vector<8x32xf32>
    %c5_i32 = arith.constant 5 : i32
    %344 = arith.truncf %343 : vector<8x32xf32> to vector<8x32xbf16>
    %345 = arith.index_cast %c5_i32 : i32 to index
    %c0_170 = arith.constant 0 : index
    %c0_171 = arith.constant 0 : index
    %346 = vector.load %arg4[%345, %c0_170, %c0_171] : memref<8x1x64xf32, #tpu.memory_space<vmem>>, vector<1x1x64xf32>
    %347 = vector.shape_cast %346 : vector<1x1x64xf32> to vector<1x64xf32>
    %c0_172 = arith.constant 0 : index
    %c0_173 = arith.constant 0 : index
    %348 = vector.load %arg8[%c0_172, %c0_173] : memref<32x64xbf16, #tpu.memory_space<vmem>>, vector<32x32xbf16>
    %cst_174 = arith.constant dense<0.000000e+00> : vector<8x32xf32>
    %349 = tpu.matmul %344, %348, %cst_174 {dimension_numbers = #tpu.dot_dimension_numbers<[1], [0], [0], [1], [0, 0, 1, 1], [], []>} : vector<8x32xbf16>, vector<32x32xbf16>, vector<8x32xf32> -> vector<8x32xf32>
    %350 = vector.extract_strided_slice %347 {offsets = [0, 0], sizes = [1, 32], strides = [1, 1]} : vector<1x64xf32> to vector<1x32xf32>
    %351 = vector.broadcast %350 : vector<1x32xf32> to vector<8x32xf32>
    %352 = arith.addf %349, %351 : vector<8x32xf32>
    %c0_175 = arith.constant 0 : index
    %c32_176 = arith.constant 32 : index
    %353 = vector.load %arg8[%c0_175, %c32_176] : memref<32x64xbf16, #tpu.memory_space<vmem>>, vector<32x32xbf16>
    %cst_177 = arith.constant dense<0.000000e+00> : vector<8x32xf32>
    %354 = tpu.matmul %344, %353, %cst_177 {dimension_numbers = #tpu.dot_dimension_numbers<[1], [0], [0], [1], [0, 0, 1, 1], [], []>} : vector<8x32xbf16>, vector<32x32xbf16>, vector<8x32xf32> -> vector<8x32xf32>
    %355 = vector.extract_strided_slice %347 {offsets = [0, 32], sizes = [1, 32], strides = [1, 1]} : vector<1x64xf32> to vector<1x32xf32>
    %356 = vector.broadcast %355 : vector<1x32xf32> to vector<8x32xf32>
    %357 = arith.addf %354, %356 : vector<8x32xf32>
    %358 = arith.negf %352 : vector<8x32xf32>
    %359 = math.exp %358 : vector<8x32xf32>
    %cst_178 = arith.constant 1.000000e+00 : f32
    %360 = vector.broadcast %cst_178 : f32 to vector<8x32xf32>
    %361 = arith.addf %360, %359 : vector<8x32xf32>
    %362 = arith.divf %360, %361 : vector<8x32xf32>
    %363 = arith.mulf %352, %362 : vector<8x32xf32>
    %364 = math.tanh %357 : vector<8x32xf32>
    %365 = arith.truncf %363 : vector<8x32xf32> to vector<8x32xbf16>
    %c0_179 = arith.constant 0 : index
    %c0_180 = arith.constant 0 : index
    %c0_181 = arith.constant 0 : index
    %366 = vector.load %arg9[%c0_179, %c0_180, %c0_181] : memref<2x32x32xbf16, #tpu.memory_space<vmem>>, vector<1x32x32xbf16>
    %367 = vector.shape_cast %366 : vector<1x32x32xbf16> to vector<32x32xbf16>
    %cst_182 = arith.constant dense<0.000000e+00> : vector<8x32xf32>
    %368 = tpu.matmul %365, %367, %cst_182 {dimension_numbers = #tpu.dot_dimension_numbers<[1], [0], [0], [1], [0, 0, 1, 1], [], []>} : vector<8x32xbf16>, vector<32x32xbf16>, vector<8x32xf32> -> vector<8x32xf32>
    %c0_183 = arith.constant 0 : index
    %c0_184 = arith.constant 0 : index
    %c0_185 = arith.constant 0 : index
    %369 = vector.load %arg10[%c0_183, %c0_184, %c0_185] : memref<2x1x32xf32, #tpu.memory_space<vmem>>, vector<1x1x32xf32>
    %370 = vector.shape_cast %369 : vector<1x1x32xf32> to vector<1x32xf32>
    %371 = vector.broadcast %370 : vector<1x32xf32> to vector<8x32xf32>
    %372 = arith.addf %368, %371 : vector<8x32xf32>
    %373 = arith.negf %372 : vector<8x32xf32>
    %374 = math.exp %373 : vector<8x32xf32>
    %cst_186 = arith.constant 1.000000e+00 : f32
    %375 = vector.broadcast %cst_186 : f32 to vector<8x32xf32>
    %376 = arith.addf %375, %374 : vector<8x32xf32>
    %377 = arith.divf %375, %376 : vector<8x32xf32>
    %378 = arith.mulf %372, %377 : vector<8x32xf32>
    %379 = arith.truncf %378 : vector<8x32xf32> to vector<8x32xbf16>
    %c1_187 = arith.constant 1 : index
    %c0_188 = arith.constant 0 : index
    %c0_189 = arith.constant 0 : index
    %380 = vector.load %arg9[%c1_187, %c0_188, %c0_189] : memref<2x32x32xbf16, #tpu.memory_space<vmem>>, vector<1x32x32xbf16>
    %381 = vector.shape_cast %380 : vector<1x32x32xbf16> to vector<32x32xbf16>
    %cst_190 = arith.constant dense<0.000000e+00> : vector<8x32xf32>
    %382 = tpu.matmul %379, %381, %cst_190 {dimension_numbers = #tpu.dot_dimension_numbers<[1], [0], [0], [1], [0, 0, 1, 1], [], []>} : vector<8x32xbf16>, vector<32x32xbf16>, vector<8x32xf32> -> vector<8x32xf32>
    %c1_191 = arith.constant 1 : index
    %c0_192 = arith.constant 0 : index
    %c0_193 = arith.constant 0 : index
    %383 = vector.load %arg10[%c1_191, %c0_192, %c0_193] : memref<2x1x32xf32, #tpu.memory_space<vmem>>, vector<1x1x32xf32>
    %384 = vector.shape_cast %383 : vector<1x1x32xf32> to vector<1x32xf32>
    %385 = vector.broadcast %384 : vector<1x32xf32> to vector<8x32xf32>
    %386 = arith.addf %382, %385 : vector<8x32xf32>
    %387 = arith.negf %386 : vector<8x32xf32>
    %388 = math.exp %387 : vector<8x32xf32>
    %cst_194 = arith.constant 1.000000e+00 : f32
    %389 = vector.broadcast %cst_194 : f32 to vector<8x32xf32>
    %390 = arith.addf %389, %388 : vector<8x32xf32>
    %391 = arith.divf %389, %390 : vector<8x32xf32>
    %392 = arith.mulf %386, %391 : vector<8x32xf32>
    %393 = arith.truncf %392 : vector<8x32xf32> to vector<8x32xbf16>
    %c0_195 = arith.constant 0 : index
    %c0_196 = arith.constant 0 : index
    %394 = vector.load %arg11[%c0_195, %c0_196] : memref<32x32xbf16, #tpu.memory_space<vmem>>, vector<32x32xbf16>
    %cst_197 = arith.constant dense<0.000000e+00> : vector<8x32xf32>
    %395 = tpu.matmul %393, %394, %cst_197 {dimension_numbers = #tpu.dot_dimension_numbers<[1], [0], [0], [1], [0, 0, 1, 1], [], []>} : vector<8x32xbf16>, vector<32x32xbf16>, vector<8x32xf32> -> vector<8x32xf32>
    %c0_198 = arith.constant 0 : index
    %c0_199 = arith.constant 0 : index
    %396 = vector.load %arg12[%c0_198, %c0_199] : memref<1x32xf32, #tpu.memory_space<vmem>>, vector<1x32xf32>
    %397 = vector.broadcast %396 : vector<1x32xf32> to vector<8x32xf32>
    %398 = arith.addf %395, %397 : vector<8x32xf32>
    %399 = math.tanh %398 : vector<8x32xf32>
    %400 = arith.index_cast %c5_i32 : i32 to index
    %c0_200 = arith.constant 0 : index
    %c0_201 = arith.constant 0 : index
    %401 = vector.load %arg5[%400, %c0_200, %c0_201] : memref<8x1x1xf32, #tpu.memory_space<vmem>>, vector<1x1x1xf32>
    %402 = vector.shape_cast %401 : vector<1x1x1xf32> to vector<1x1xf32>
    %403 = vector.broadcast %402 : vector<1x1xf32> to vector<8x32xf32>
    %404 = arith.mulf %399, %403 : vector<8x32xf32>
    %405 = arith.addf %343, %404 : vector<8x32xf32>
    %406 = arith.index_cast %c5_i32 : i32 to index
    %c0_202 = arith.constant 0 : index
    %c0_203 = arith.constant 0 : index
    %407 = vector.load %arg3[%406, %c0_202, %c0_203] : memref<8x8x32xbf16, #tpu.memory_space<vmem>>, vector<1x8x32xbf16>
    %408 = vector.shape_cast %407 : vector<1x8x32xbf16> to vector<8x32xbf16>
    %409 = arith.extf %408 : vector<8x32xbf16> to vector<8x32xf32>
    %410 = arith.mulf %364, %409 : vector<8x32xf32>
    %411 = arith.addf %405, %410 : vector<8x32xf32>
    %c6_i32 = arith.constant 6 : i32
    %412 = arith.truncf %411 : vector<8x32xf32> to vector<8x32xbf16>
    %413 = arith.index_cast %c6_i32 : i32 to index
    %c0_204 = arith.constant 0 : index
    %c0_205 = arith.constant 0 : index
    %414 = vector.load %arg4[%413, %c0_204, %c0_205] : memref<8x1x64xf32, #tpu.memory_space<vmem>>, vector<1x1x64xf32>
    %415 = vector.shape_cast %414 : vector<1x1x64xf32> to vector<1x64xf32>
    %c0_206 = arith.constant 0 : index
    %c0_207 = arith.constant 0 : index
    %416 = vector.load %arg8[%c0_206, %c0_207] : memref<32x64xbf16, #tpu.memory_space<vmem>>, vector<32x32xbf16>
    %cst_208 = arith.constant dense<0.000000e+00> : vector<8x32xf32>
    %417 = tpu.matmul %412, %416, %cst_208 {dimension_numbers = #tpu.dot_dimension_numbers<[1], [0], [0], [1], [0, 0, 1, 1], [], []>} : vector<8x32xbf16>, vector<32x32xbf16>, vector<8x32xf32> -> vector<8x32xf32>
    %418 = vector.extract_strided_slice %415 {offsets = [0, 0], sizes = [1, 32], strides = [1, 1]} : vector<1x64xf32> to vector<1x32xf32>
    %419 = vector.broadcast %418 : vector<1x32xf32> to vector<8x32xf32>
    %420 = arith.addf %417, %419 : vector<8x32xf32>
    %c0_209 = arith.constant 0 : index
    %c32_210 = arith.constant 32 : index
    %421 = vector.load %arg8[%c0_209, %c32_210] : memref<32x64xbf16, #tpu.memory_space<vmem>>, vector<32x32xbf16>
    %cst_211 = arith.constant dense<0.000000e+00> : vector<8x32xf32>
    %422 = tpu.matmul %412, %421, %cst_211 {dimension_numbers = #tpu.dot_dimension_numbers<[1], [0], [0], [1], [0, 0, 1, 1], [], []>} : vector<8x32xbf16>, vector<32x32xbf16>, vector<8x32xf32> -> vector<8x32xf32>
    %423 = vector.extract_strided_slice %415 {offsets = [0, 32], sizes = [1, 32], strides = [1, 1]} : vector<1x64xf32> to vector<1x32xf32>
    %424 = vector.broadcast %423 : vector<1x32xf32> to vector<8x32xf32>
    %425 = arith.addf %422, %424 : vector<8x32xf32>
    %426 = arith.negf %420 : vector<8x32xf32>
    %427 = math.exp %426 : vector<8x32xf32>
    %cst_212 = arith.constant 1.000000e+00 : f32
    %428 = vector.broadcast %cst_212 : f32 to vector<8x32xf32>
    %429 = arith.addf %428, %427 : vector<8x32xf32>
    %430 = arith.divf %428, %429 : vector<8x32xf32>
    %431 = arith.mulf %420, %430 : vector<8x32xf32>
    %432 = math.tanh %425 : vector<8x32xf32>
    %433 = arith.truncf %431 : vector<8x32xf32> to vector<8x32xbf16>
    %c0_213 = arith.constant 0 : index
    %c0_214 = arith.constant 0 : index
    %c0_215 = arith.constant 0 : index
    %434 = vector.load %arg9[%c0_213, %c0_214, %c0_215] : memref<2x32x32xbf16, #tpu.memory_space<vmem>>, vector<1x32x32xbf16>
    %435 = vector.shape_cast %434 : vector<1x32x32xbf16> to vector<32x32xbf16>
    %cst_216 = arith.constant dense<0.000000e+00> : vector<8x32xf32>
    %436 = tpu.matmul %433, %435, %cst_216 {dimension_numbers = #tpu.dot_dimension_numbers<[1], [0], [0], [1], [0, 0, 1, 1], [], []>} : vector<8x32xbf16>, vector<32x32xbf16>, vector<8x32xf32> -> vector<8x32xf32>
    %c0_217 = arith.constant 0 : index
    %c0_218 = arith.constant 0 : index
    %c0_219 = arith.constant 0 : index
    %437 = vector.load %arg10[%c0_217, %c0_218, %c0_219] : memref<2x1x32xf32, #tpu.memory_space<vmem>>, vector<1x1x32xf32>
    %438 = vector.shape_cast %437 : vector<1x1x32xf32> to vector<1x32xf32>
    %439 = vector.broadcast %438 : vector<1x32xf32> to vector<8x32xf32>
    %440 = arith.addf %436, %439 : vector<8x32xf32>
    %441 = arith.negf %440 : vector<8x32xf32>
    %442 = math.exp %441 : vector<8x32xf32>
    %cst_220 = arith.constant 1.000000e+00 : f32
    %443 = vector.broadcast %cst_220 : f32 to vector<8x32xf32>
    %444 = arith.addf %443, %442 : vector<8x32xf32>
    %445 = arith.divf %443, %444 : vector<8x32xf32>
    %446 = arith.mulf %440, %445 : vector<8x32xf32>
    %447 = arith.truncf %446 : vector<8x32xf32> to vector<8x32xbf16>
    %c1_221 = arith.constant 1 : index
    %c0_222 = arith.constant 0 : index
    %c0_223 = arith.constant 0 : index
    %448 = vector.load %arg9[%c1_221, %c0_222, %c0_223] : memref<2x32x32xbf16, #tpu.memory_space<vmem>>, vector<1x32x32xbf16>
    %449 = vector.shape_cast %448 : vector<1x32x32xbf16> to vector<32x32xbf16>
    %cst_224 = arith.constant dense<0.000000e+00> : vector<8x32xf32>
    %450 = tpu.matmul %447, %449, %cst_224 {dimension_numbers = #tpu.dot_dimension_numbers<[1], [0], [0], [1], [0, 0, 1, 1], [], []>} : vector<8x32xbf16>, vector<32x32xbf16>, vector<8x32xf32> -> vector<8x32xf32>
    %c1_225 = arith.constant 1 : index
    %c0_226 = arith.constant 0 : index
    %c0_227 = arith.constant 0 : index
    %451 = vector.load %arg10[%c1_225, %c0_226, %c0_227] : memref<2x1x32xf32, #tpu.memory_space<vmem>>, vector<1x1x32xf32>
    %452 = vector.shape_cast %451 : vector<1x1x32xf32> to vector<1x32xf32>
    %453 = vector.broadcast %452 : vector<1x32xf32> to vector<8x32xf32>
    %454 = arith.addf %450, %453 : vector<8x32xf32>
    %455 = arith.negf %454 : vector<8x32xf32>
    %456 = math.exp %455 : vector<8x32xf32>
    %cst_228 = arith.constant 1.000000e+00 : f32
    %457 = vector.broadcast %cst_228 : f32 to vector<8x32xf32>
    %458 = arith.addf %457, %456 : vector<8x32xf32>
    %459 = arith.divf %457, %458 : vector<8x32xf32>
    %460 = arith.mulf %454, %459 : vector<8x32xf32>
    %461 = arith.truncf %460 : vector<8x32xf32> to vector<8x32xbf16>
    %c0_229 = arith.constant 0 : index
    %c0_230 = arith.constant 0 : index
    %462 = vector.load %arg11[%c0_229, %c0_230] : memref<32x32xbf16, #tpu.memory_space<vmem>>, vector<32x32xbf16>
    %cst_231 = arith.constant dense<0.000000e+00> : vector<8x32xf32>
    %463 = tpu.matmul %461, %462, %cst_231 {dimension_numbers = #tpu.dot_dimension_numbers<[1], [0], [0], [1], [0, 0, 1, 1], [], []>} : vector<8x32xbf16>, vector<32x32xbf16>, vector<8x32xf32> -> vector<8x32xf32>
    %c0_232 = arith.constant 0 : index
    %c0_233 = arith.constant 0 : index
    %464 = vector.load %arg12[%c0_232, %c0_233] : memref<1x32xf32, #tpu.memory_space<vmem>>, vector<1x32xf32>
    %465 = vector.broadcast %464 : vector<1x32xf32> to vector<8x32xf32>
    %466 = arith.addf %463, %465 : vector<8x32xf32>
    %467 = math.tanh %466 : vector<8x32xf32>
    %468 = arith.index_cast %c6_i32 : i32 to index
    %c0_234 = arith.constant 0 : index
    %c0_235 = arith.constant 0 : index
    %469 = vector.load %arg5[%468, %c0_234, %c0_235] : memref<8x1x1xf32, #tpu.memory_space<vmem>>, vector<1x1x1xf32>
    %470 = vector.shape_cast %469 : vector<1x1x1xf32> to vector<1x1xf32>
    %471 = vector.broadcast %470 : vector<1x1xf32> to vector<8x32xf32>
    %472 = arith.mulf %467, %471 : vector<8x32xf32>
    %473 = arith.addf %411, %472 : vector<8x32xf32>
    %474 = arith.index_cast %c6_i32 : i32 to index
    %c0_236 = arith.constant 0 : index
    %c0_237 = arith.constant 0 : index
    %475 = vector.load %arg3[%474, %c0_236, %c0_237] : memref<8x8x32xbf16, #tpu.memory_space<vmem>>, vector<1x8x32xbf16>
    %476 = vector.shape_cast %475 : vector<1x8x32xbf16> to vector<8x32xbf16>
    %477 = arith.extf %476 : vector<8x32xbf16> to vector<8x32xf32>
    %478 = arith.mulf %432, %477 : vector<8x32xf32>
    %479 = arith.addf %473, %478 : vector<8x32xf32>
    %c7_i32 = arith.constant 7 : i32
    %480 = arith.truncf %479 : vector<8x32xf32> to vector<8x32xbf16>
    %481 = arith.index_cast %c7_i32 : i32 to index
    %c0_238 = arith.constant 0 : index
    %c0_239 = arith.constant 0 : index
    %482 = vector.load %arg4[%481, %c0_238, %c0_239] : memref<8x1x64xf32, #tpu.memory_space<vmem>>, vector<1x1x64xf32>
    %483 = vector.shape_cast %482 : vector<1x1x64xf32> to vector<1x64xf32>
    %c0_240 = arith.constant 0 : index
    %c0_241 = arith.constant 0 : index
    %484 = vector.load %arg8[%c0_240, %c0_241] : memref<32x64xbf16, #tpu.memory_space<vmem>>, vector<32x32xbf16>
    %cst_242 = arith.constant dense<0.000000e+00> : vector<8x32xf32>
    %485 = tpu.matmul %480, %484, %cst_242 {dimension_numbers = #tpu.dot_dimension_numbers<[1], [0], [0], [1], [0, 0, 1, 1], [], []>} : vector<8x32xbf16>, vector<32x32xbf16>, vector<8x32xf32> -> vector<8x32xf32>
    %486 = vector.extract_strided_slice %483 {offsets = [0, 0], sizes = [1, 32], strides = [1, 1]} : vector<1x64xf32> to vector<1x32xf32>
    %487 = vector.broadcast %486 : vector<1x32xf32> to vector<8x32xf32>
    %488 = arith.addf %485, %487 : vector<8x32xf32>
    %c0_243 = arith.constant 0 : index
    %c32_244 = arith.constant 32 : index
    %489 = vector.load %arg8[%c0_243, %c32_244] : memref<32x64xbf16, #tpu.memory_space<vmem>>, vector<32x32xbf16>
    %cst_245 = arith.constant dense<0.000000e+00> : vector<8x32xf32>
    %490 = tpu.matmul %480, %489, %cst_245 {dimension_numbers = #tpu.dot_dimension_numbers<[1], [0], [0], [1], [0, 0, 1, 1], [], []>} : vector<8x32xbf16>, vector<32x32xbf16>, vector<8x32xf32> -> vector<8x32xf32>
    %491 = vector.extract_strided_slice %483 {offsets = [0, 32], sizes = [1, 32], strides = [1, 1]} : vector<1x64xf32> to vector<1x32xf32>
    %492 = vector.broadcast %491 : vector<1x32xf32> to vector<8x32xf32>
    %493 = arith.addf %490, %492 : vector<8x32xf32>
    %494 = arith.negf %488 : vector<8x32xf32>
    %495 = math.exp %494 : vector<8x32xf32>
    %cst_246 = arith.constant 1.000000e+00 : f32
    %496 = vector.broadcast %cst_246 : f32 to vector<8x32xf32>
    %497 = arith.addf %496, %495 : vector<8x32xf32>
    %498 = arith.divf %496, %497 : vector<8x32xf32>
    %499 = arith.mulf %488, %498 : vector<8x32xf32>
    %500 = math.tanh %493 : vector<8x32xf32>
    %501 = arith.truncf %499 : vector<8x32xf32> to vector<8x32xbf16>
    %c0_247 = arith.constant 0 : index
    %c0_248 = arith.constant 0 : index
    %c0_249 = arith.constant 0 : index
    %502 = vector.load %arg9[%c0_247, %c0_248, %c0_249] : memref<2x32x32xbf16, #tpu.memory_space<vmem>>, vector<1x32x32xbf16>
    %503 = vector.shape_cast %502 : vector<1x32x32xbf16> to vector<32x32xbf16>
    %cst_250 = arith.constant dense<0.000000e+00> : vector<8x32xf32>
    %504 = tpu.matmul %501, %503, %cst_250 {dimension_numbers = #tpu.dot_dimension_numbers<[1], [0], [0], [1], [0, 0, 1, 1], [], []>} : vector<8x32xbf16>, vector<32x32xbf16>, vector<8x32xf32> -> vector<8x32xf32>
    %c0_251 = arith.constant 0 : index
    %c0_252 = arith.constant 0 : index
    %c0_253 = arith.constant 0 : index
    %505 = vector.load %arg10[%c0_251, %c0_252, %c0_253] : memref<2x1x32xf32, #tpu.memory_space<vmem>>, vector<1x1x32xf32>
    %506 = vector.shape_cast %505 : vector<1x1x32xf32> to vector<1x32xf32>
    %507 = vector.broadcast %506 : vector<1x32xf32> to vector<8x32xf32>
    %508 = arith.addf %504, %507 : vector<8x32xf32>
    %509 = arith.negf %508 : vector<8x32xf32>
    %510 = math.exp %509 : vector<8x32xf32>
    %cst_254 = arith.constant 1.000000e+00 : f32
    %511 = vector.broadcast %cst_254 : f32 to vector<8x32xf32>
    %512 = arith.addf %511, %510 : vector<8x32xf32>
    %513 = arith.divf %511, %512 : vector<8x32xf32>
    %514 = arith.mulf %508, %513 : vector<8x32xf32>
    %515 = arith.truncf %514 : vector<8x32xf32> to vector<8x32xbf16>
    %c1_255 = arith.constant 1 : index
    %c0_256 = arith.constant 0 : index
    %c0_257 = arith.constant 0 : index
    %516 = vector.load %arg9[%c1_255, %c0_256, %c0_257] : memref<2x32x32xbf16, #tpu.memory_space<vmem>>, vector<1x32x32xbf16>
    %517 = vector.shape_cast %516 : vector<1x32x32xbf16> to vector<32x32xbf16>
    %cst_258 = arith.constant dense<0.000000e+00> : vector<8x32xf32>
    %518 = tpu.matmul %515, %517, %cst_258 {dimension_numbers = #tpu.dot_dimension_numbers<[1], [0], [0], [1], [0, 0, 1, 1], [], []>} : vector<8x32xbf16>, vector<32x32xbf16>, vector<8x32xf32> -> vector<8x32xf32>
    %c1_259 = arith.constant 1 : index
    %c0_260 = arith.constant 0 : index
    %c0_261 = arith.constant 0 : index
    %519 = vector.load %arg10[%c1_259, %c0_260, %c0_261] : memref<2x1x32xf32, #tpu.memory_space<vmem>>, vector<1x1x32xf32>
    %520 = vector.shape_cast %519 : vector<1x1x32xf32> to vector<1x32xf32>
    %521 = vector.broadcast %520 : vector<1x32xf32> to vector<8x32xf32>
    %522 = arith.addf %518, %521 : vector<8x32xf32>
    %523 = arith.negf %522 : vector<8x32xf32>
    %524 = math.exp %523 : vector<8x32xf32>
    %cst_262 = arith.constant 1.000000e+00 : f32
    %525 = vector.broadcast %cst_262 : f32 to vector<8x32xf32>
    %526 = arith.addf %525, %524 : vector<8x32xf32>
    %527 = arith.divf %525, %526 : vector<8x32xf32>
    %528 = arith.mulf %522, %527 : vector<8x32xf32>
    %529 = arith.truncf %528 : vector<8x32xf32> to vector<8x32xbf16>
    %c0_263 = arith.constant 0 : index
    %c0_264 = arith.constant 0 : index
    %530 = vector.load %arg11[%c0_263, %c0_264] : memref<32x32xbf16, #tpu.memory_space<vmem>>, vector<32x32xbf16>
    %cst_265 = arith.constant dense<0.000000e+00> : vector<8x32xf32>
    %531 = tpu.matmul %529, %530, %cst_265 {dimension_numbers = #tpu.dot_dimension_numbers<[1], [0], [0], [1], [0, 0, 1, 1], [], []>} : vector<8x32xbf16>, vector<32x32xbf16>, vector<8x32xf32> -> vector<8x32xf32>
    %c0_266 = arith.constant 0 : index
    %c0_267 = arith.constant 0 : index
    %532 = vector.load %arg12[%c0_266, %c0_267] : memref<1x32xf32, #tpu.memory_space<vmem>>, vector<1x32xf32>
    %533 = vector.broadcast %532 : vector<1x32xf32> to vector<8x32xf32>
    %534 = arith.addf %531, %533 : vector<8x32xf32>
    %535 = math.tanh %534 : vector<8x32xf32>
    %536 = arith.index_cast %c7_i32 : i32 to index
    %c0_268 = arith.constant 0 : index
    %c0_269 = arith.constant 0 : index
    %537 = vector.load %arg5[%536, %c0_268, %c0_269] : memref<8x1x1xf32, #tpu.memory_space<vmem>>, vector<1x1x1xf32>
    %538 = vector.shape_cast %537 : vector<1x1x1xf32> to vector<1x1xf32>
    %539 = vector.broadcast %538 : vector<1x1xf32> to vector<8x32xf32>
    %540 = arith.mulf %535, %539 : vector<8x32xf32>
    %541 = arith.addf %479, %540 : vector<8x32xf32>
    %542 = arith.index_cast %c7_i32 : i32 to index
    %c0_270 = arith.constant 0 : index
    %c0_271 = arith.constant 0 : index
    %543 = vector.load %arg3[%542, %c0_270, %c0_271] : memref<8x8x32xbf16, #tpu.memory_space<vmem>>, vector<1x8x32xbf16>
    %544 = vector.shape_cast %543 : vector<1x8x32xbf16> to vector<8x32xbf16>
    %545 = arith.extf %544 : vector<8x32xbf16> to vector<8x32xf32>
    %546 = arith.mulf %500, %545 : vector<8x32xf32>
    %547 = arith.addf %541, %546 : vector<8x32xf32>
    %c8_i32 = arith.constant 8 : i32
    %c0_272 = arith.constant 0 : index
    %c0_273 = arith.constant 0 : index
    %548 = vector.load %arg16[%c0_272, %c0_273] : memref<8x32xf32, #tpu.memory_space<vmem>>, vector<8x32xf32>
    tpu.vector_store %arg16[%c0_272, %c0_273], %547 {strides = array<i32>} : memref<8x32xf32, #tpu.memory_space<vmem>>, vector<8x32xf32>,
    %c0_i32_274 = arith.constant 0 : i32
    %549 = arith.cmpi eq, %arg1, %c0_i32_274 : i32
    %550 = arith.extui %549 : i1 to i32
    %c0_i32_275 = arith.constant 0 : i32
    %551 = arith.cmpi ne, %550, %c0_i32_275 : i32
    scf.if %551 {
      %c0_276 = arith.constant 0 : index
      %c0_277 = arith.constant 0 : index
      %552 = vector.load %arg13[%c0_276, %c0_277] : memref<32x128xf32, #tpu.memory_space<vmem>>, vector<32x128xf32>
      %cst_278 = arith.constant dense<0.000000e+00> : vector<8x128xf32>
      %553 = tpu.matmul %547, %552, %cst_278 {dimension_numbers = #tpu.dot_dimension_numbers<[1], [0], [0], [1], [0, 0, 1, 1], [], []>} : vector<8x32xf32>, vector<32x128xf32>, vector<8x128xf32> -> vector<8x128xf32>
      %c0_279 = arith.constant 0 : index
      %c0_280 = arith.constant 0 : index
      %554 = vector.load %arg14[%c0_279, %c0_280] : memref<1x128xf32, #tpu.memory_space<vmem>>, vector<1x128xf32>
      %555 = vector.broadcast %554 : vector<1x128xf32> to vector<8x128xf32>
      %556 = arith.addf %553, %555 : vector<8x128xf32>
      %c0_281 = arith.constant 0 : index
      %c0_282 = arith.constant 0 : index
      %557 = vector.load %arg15[%c0_281, %c0_282] : memref<8x128xf32, #tpu.memory_space<vmem>>, vector<8x128xf32>
      tpu.vector_store %arg15[%c0_281, %c0_282], %556 {strides = array<i32>} : memref<8x128xf32, #tpu.memory_space<vmem>>, vector<8x128xf32>,
    } else {
    }
    return
  }
  func.func @transform_0(%arg0: i32, %arg1: i32) -> (i32, i32) {
    %c0_i32 = arith.constant 0 : i32
    %c0_i32_0 = arith.constant 0 : i32
    return %arg0, %c0_i32 : i32, i32
  }
  func.func @transform_1(%arg0: i32, %arg1: i32) -> (i32, i32, i32) {
    %c0_i32 = arith.constant 0 : i32
    %c0_i32_0 = arith.constant 0 : i32
    return %arg1, %arg0, %c0_i32 : i32, i32, i32
  }
  func.func @transform_2(%arg0: i32, %arg1: i32) -> (i32, i32, i32) {
    %c0_i32 = arith.constant 0 : i32
    %c0_i32_0 = arith.constant 0 : i32
    %c0_i32_1 = arith.constant 0 : i32
    return %arg1, %c0_i32, %c0_i32_0 : i32, i32, i32
  }
  func.func @transform_3(%arg0: i32, %arg1: i32) -> (i32, i32, i32) {
    %c0_i32 = arith.constant 0 : i32
    %c0_i32_0 = arith.constant 0 : i32
    %c0_i32_1 = arith.constant 0 : i32
    return %arg1, %c0_i32, %c0_i32_0 : i32, i32, i32
  }
  func.func @transform_4(%arg0: i32, %arg1: i32) -> (i32, i32) {
    %c0_i32 = arith.constant 0 : i32
    %c0_i32_0 = arith.constant 0 : i32
    %c0_i32_1 = arith.constant 0 : i32
    return %c0_i32, %c0_i32_0 : i32, i32
  }
  func.func @transform_5(%arg0: i32, %arg1: i32) -> (i32, i32) {
    %c0_i32 = arith.constant 0 : i32
    %c0_i32_0 = arith.constant 0 : i32
    %c0_i32_1 = arith.constant 0 : i32
    return %c0_i32, %c0_i32_0 : i32, i32
  }
  func.func @transform_6(%arg0: i32, %arg1: i32) -> (i32, i32) {
    %c0_i32 = arith.constant 0 : i32
    %c0_i32_0 = arith.constant 0 : i32
    %c0_i32_1 = arith.constant 0 : i32
    return %c0_i32, %c0_i32_0 : i32, i32
  }
  func.func @transform_7(%arg0: i32, %arg1: i32) -> (i32, i32, i32) {
    %c0_i32 = arith.constant 0 : i32
    %c0_i32_0 = arith.constant 0 : i32
    %c0_i32_1 = arith.constant 0 : i32
    %c0_i32_2 = arith.constant 0 : i32
    return %c0_i32, %c0_i32_0, %c0_i32_1 : i32, i32, i32
  }
  func.func @transform_8(%arg0: i32, %arg1: i32) -> (i32, i32, i32) {
    %c0_i32 = arith.constant 0 : i32
    %c0_i32_0 = arith.constant 0 : i32
    %c0_i32_1 = arith.constant 0 : i32
    %c0_i32_2 = arith.constant 0 : i32
    return %c0_i32, %c0_i32_0, %c0_i32_1 : i32, i32, i32
  }
  func.func @transform_9(%arg0: i32, %arg1: i32) -> (i32, i32) {
    %c0_i32 = arith.constant 0 : i32
    %c0_i32_0 = arith.constant 0 : i32
    %c0_i32_1 = arith.constant 0 : i32
    return %c0_i32, %c0_i32_0 : i32, i32
  }
  func.func @transform_10(%arg0: i32, %arg1: i32) -> (i32, i32) {
    %c0_i32 = arith.constant 0 : i32
    %c0_i32_0 = arith.constant 0 : i32
    %c0_i32_1 = arith.constant 0 : i32
    return %c0_i32, %c0_i32_0 : i32, i32
  }
  func.func @transform_11(%arg0: i32, %arg1: i32) -> (i32, i32) {
    %c0_i32 = arith.constant 0 : i32
    %c0_i32_0 = arith.constant 0 : i32
    %c0_i32_1 = arith.constant 0 : i32
    return %c0_i32, %c0_i32_0 : i32, i32
  }
  func.func @transform_12(%arg0: i32, %arg1: i32) -> (i32, i32) {
    %c0_i32 = arith.constant 0 : i32
    %c0_i32_0 = arith.constant 0 : i32
    %c0_i32_1 = arith.constant 0 : i32
    return %c0_i32, %c0_i32_0 : i32, i32
  }
  func.func @transform_13(%arg0: i32, %arg1: i32) -> (i32, i32) {
    %c0_i32 = arith.constant 0 : i32
    %c0_i32_0 = arith.constant 0 : i32
    return %arg0, %c0_i32 : i32, i32
  }
}

</mosaic_0001>

<llo_original>
// kernel: tpu_custom_call.1
$region0: #{tpu_custom_call.1}
  #allocation0 [shape = 'u32[]', space=smem, size = 0x4, offset = 0x4, fixed_abs, tag = 'smem constant byte address 0x4 - core index']
  #allocation1 [shape = 'u32[72,128]{1,0:T(1,128)}', space=vmem, size = 0x9000, scoped, tag = 'internal scratch']
  #allocation2 [shape = 'f32[8,32]{1,0:T(8,128)}', space=vmem, size = 0x1000, scoped, tag = 'scratch operand']
  %s0 = inlined_call_operand.vmem [shape: f32[8,4], index: 0, kind: input, shape index: {}]
  %s1 = inlined_call_operand.hbm [shape: bf16[8,8,32], index: 1, kind: input, shape index: {}]
  %s2 = inlined_call_operand.vmem [shape: f32[8,1,64], index: 2, kind: input, shape index: {}]
  %s3 = inlined_call_operand.vmem [shape: f32[8,1,1], index: 3, kind: input, shape index: {}]
  %s4 = inlined_call_operand.hbm [shape: f32[4,32], index: 4, kind: input, shape index: {}]
  %s5 = inlined_call_operand.vmem [shape: f32[1,32], index: 5, kind: input, shape index: {}]
  %s6 = inlined_call_operand.vmem [shape: bf16[32,64], index: 6, kind: input, shape index: {}]
  %s7 = inlined_call_operand.hbm [shape: bf16[2,32,32], index: 7, kind: input, shape index: {}]
  %s8 = inlined_call_operand.vmem [shape: f32[2,1,32], index: 8, kind: input, shape index: {}]
  %s9 = inlined_call_operand.hbm [shape: bf16[32,32], index: 9, kind: input, shape index: {}]
  %s10 = inlined_call_operand.vmem [shape: f32[1,32], index: 10, kind: input, shape index: {}]
  %s11 = inlined_call_operand.hbm [shape: f32[32,128], index: 11, kind: input, shape index: {}]
  %s12 = inlined_call_operand.vmem [shape: f32[1,128], index: 12, kind: input, shape index: {}]
  %s13 = inlined_call_operand.hbm [shape: f32[8,128], index: 13, kind: output, shape index: {}]
  %s14 = sld [smem:[#allocation0]]
  $region90: #{tpu_custom_call.1} parent=0
    _
  %s16 = ssub.s32 1, %s14
  %s17 = scalar_select 0, %s16, %s14
  $region1: #{tpu_custom_call.1} parent=0
    #allocation3 [shape = 'u8[16384]{0}', space=vmem, size = 0x4000, scoped, tag = 'input window, operand 1, single buffered']
    #allocation4 [shape = 's32[1]{0}', space=sflag, size = 0x4, scoped, tag = 'scoped memory for tpu_custom_call.1']
    #allocation5 [shape = 's32[1]{0}', space=sflag, size = 0x4, scoped, tag = 'scoped memory for tpu_custom_call.1']
    #allocation6 [shape = 'u8[2048]{0}', space=vmem, size = 0x800, scoped, tag = 'input window, operand 4, single buffered']
    #allocation7 [shape = 's32[1]{0}', space=sflag, size = 0x4, scoped, tag = 'scoped memory for tpu_custom_call.1']
    #allocation8 [shape = 'u8[16384]{0}', space=vmem, size = 0x4000, scoped, tag = 'input window, operand 7, single buffered']
    #allocation9 [shape = 'u8[8192]{0}', space=vmem, size = 0x2000, scoped, tag = 'input window, operand 9, single buffered']
    #allocation10 [shape = 's32[1]{0}', space=sflag, size = 0x4, scoped, tag = 'scoped memory for tpu_custom_call.1']
    #allocation11 [shape = 'u8[16384]{0}', space=vmem, size = 0x4000, scoped, tag = 'input window, operand 11, single buffered']
    #allocation12 [shape = 'u8[4096]{0}', space=vmem, size = 0x1000, scoped, tag = 'output window, operand 0, single buffered']
    %18 = vsyncpa [#allocation4], 0
    %19 = vsyncpa [#allocation7], 0
    %20 = vsyncpa [#allocation10], 0
    %21 = vsyncpa [#allocation5], 0
    // Predicated region
    $region2: #{tpu_custom_call.1} parent=1 // pred_check
      _
    $region3: #{tpu_custom_call.1} parent=1 // pred_check_branch
      %23 = sbr.rel (0) target = $region5
    $region4: #{tpu_custom_call.1} parent=1 // pred_region
      _
    $region5: #{tpu_custom_call.1} parent=1 // pred_fallthru
      _
    // Predicated region
    $region6: #{tpu_custom_call.1} parent=1 // pred_check
      _
    $region7: #{tpu_custom_call.1} parent=1 // pred_check_branch
      %25 = sbr.rel (0) target = $region9
    $region8: #{tpu_custom_call.1} parent=1 // pred_region
      %27 = vsyncadd [#allocation4], 0
      %s28 = sshll.u32 %s1, 4
      %s29 = int_to_ptr.hbm [resolvable:$true] %s28
      %s30 = sshll.u32 [#allocation3], 4
      %s31 = int_to_ptr.vmem [resolvable:$true] %s30
      %36 = dma.hbm_to_vmem [thread:$0]  %s29, 512, %s31, [#allocation4], 64, 64, 4
    $region9: #{tpu_custom_call.1} parent=1 // pred_fallthru
      _
    // Predicated region
    $region10: #{tpu_custom_call.1} parent=1 // pred_check
      _
    $region11: #{tpu_custom_call.1} parent=1 // pred_check_branch
      %38 = sbr.rel (0) target = $region13
    $region12: #{tpu_custom_call.1} parent=1 // pred_region
      _
    $region13: #{tpu_custom_call.1} parent=1 // pred_fallthru
      _
    // Predicated region
    $region14: #{tpu_custom_call.1} parent=1 // pred_check
      _
    $region15: #{tpu_custom_call.1} parent=1 // pred_check_branch
      %40 = sbr.rel (0) target = $region17
    $region16: #{tpu_custom_call.1} parent=1 // pred_region
      _
    $region17: #{tpu_custom_call.1} parent=1 // pred_fallthru
      _
    // Predicated region
    $region18: #{tpu_custom_call.1} parent=1 // pred_check
      _
    $region19: #{tpu_custom_call.1} parent=1 // pred_check_branch
      %42 = sbr.rel (0) target = $region21
    $region20: #{tpu_custom_call.1} parent=1 // pred_region
      %44 = vsyncadd [#allocation7], 0
      %s46 = sshll.u32 %s4, 4
      %s47 = int_to_ptr.hbm [resolvable:$true] %s46
      %s48 = sshll.u32 [#allocation6], 4
      %s49 = int_to_ptr.vmem [resolvable:$true] %s48
      %51 = dma.hbm_to_vmem [thread:$0]  %s47, 64, %s49, [#allocation7]
    $region21: #{tpu_custom_call.1} parent=1 // pred_fallthru
      _
    // Predicated region
    $region22: #{tpu_custom_call.1} parent=1 // pred_check
      _
    $region23: #{tpu_custom_call.1} parent=1 // pred_check_branch
      %53 = sbr.rel (0) target = $region25
    $region24: #{tpu_custom_call.1} parent=1 // pred_region
      _
    $region25: #{tpu_custom_call.1} parent=1 // pred_fallthru
      _
    // Predicated region
    $region26: #{tpu_custom_call.1} parent=1 // pred_check
      _
    $region27: #{tpu_custom_call.1} parent=1 // pred_check_branch
      %55 = sbr.rel (0) target = $region29
    $region28: #{tpu_custom_call.1} parent=1 // pred_region
      _
    $region29: #{tpu_custom_call.1} parent=1 // pred_fallthru
      _
    // Predicated region
    $region30: #{tpu_custom_call.1} parent=1 // pred_check
      _
    $region31: #{tpu_custom_call.1} parent=1 // pred_check_branch
      %57 = sbr.rel (0) target = $region33
    $region32: #{tpu_custom_call.1} parent=1 // pred_region
      %59 = vsyncadd [#allocation7], 0
      %s60 = sshll.u32 %s7, 4
      %s61 = int_to_ptr.hbm [resolvable:$true] %s60
      %s62 = sshll.u32 [#allocation8], 4
      %s63 = int_to_ptr.vmem [resolvable:$true] %s62
      %68 = dma.hbm_to_vmem [thread:$0]  %s61, 512, %s63, [#allocation7], 64, 64, 4
    $region33: #{tpu_custom_call.1} parent=1 // pred_fallthru
      _
    // Predicated region
    $region34: #{tpu_custom_call.1} parent=1 // pred_check
      _
    $region35: #{tpu_custom_call.1} parent=1 // pred_check_branch
      %70 = sbr.rel (0) target = $region37
    $region36: #{tpu_custom_call.1} parent=1 // pred_region
      _
    $region37: #{tpu_custom_call.1} parent=1 // pred_fallthru
      _
    // Predicated region
    $region38: #{tpu_custom_call.1} parent=1 // pred_check
      _
    $region39: #{tpu_custom_call.1} parent=1 // pred_check_branch
      %72 = sbr.rel (0) target = $region41
    $region40: #{tpu_custom_call.1} parent=1 // pred_region
      %74 = vsyncadd [#allocation10], 0
      %s75 = sshll.u32 %s9, 4
      %s76 = int_to_ptr.hbm [resolvable:$true] %s75
      %s77 = sshll.u32 [#allocation9], 4
      %s78 = int_to_ptr.vmem [resolvable:$true] %s77
      %83 = dma.hbm_to_vmem [thread:$0]  %s76, 256, %s78, [#allocation10], 64, 64, 4
    $region41: #{tpu_custom_call.1} parent=1 // pred_fallthru
      _
    // Predicated region
    $region42: #{tpu_custom_call.1} parent=1 // pred_check
      _
    $region43: #{tpu_custom_call.1} parent=1 // pred_check_branch
      %85 = sbr.rel (0) target = $region45
    $region44: #{tpu_custom_call.1} parent=1 // pred_region
      _
    $region45: #{tpu_custom_call.1} parent=1 // pred_fallthru
      _
    // Predicated region
    $region46: #{tpu_custom_call.1} parent=1 // pred_check
      _
    $region47: #{tpu_custom_call.1} parent=1 // pred_check_branch
      %87 = sbr.rel (0) target = $region49
    $region48: #{tpu_custom_call.1} parent=1 // pred_region
      %89 = vsyncadd [#allocation10], 0
      %s90 = sshll.u32 %s11, 4
      %s91 = int_to_ptr.hbm [resolvable:$true] %s90
      %s92 = sshll.u32 [#allocation11], 4
      %s93 = int_to_ptr.vmem [resolvable:$true] %s92
      %98 = dma.hbm_to_vmem [thread:$0]  %s91, 512, %s93, [#allocation10], 128, 128, 8
    $region49: #{tpu_custom_call.1} parent=1 // pred_fallthru
      _
    // Predicated region
    $region50: #{tpu_custom_call.1} parent=1 // pred_check
      _
    $region51: #{tpu_custom_call.1} parent=1 // pred_check_branch
      %100 = sbr.rel (0) target = $region53
    $region52: #{tpu_custom_call.1} parent=1 // pred_region
      _
    $region53: #{tpu_custom_call.1} parent=1 // pred_fallthru
      _
    // Predicated region
    $region54: #{tpu_custom_call.1} parent=1 // pred_check
      _
    $region55: #{tpu_custom_call.1} parent=1 // pred_check_branch
      %102 = sbr.rel (0) target = $region57
    $region56: #{tpu_custom_call.1} parent=1 // pred_region
      %104 = dma.done [#allocation4], 512
    $region57: #{tpu_custom_call.1} parent=1 // pred_fallthru
      _
    // Predicated region
    $region58: #{tpu_custom_call.1} parent=1 // pred_check
      _
    $region59: #{tpu_custom_call.1} parent=1 // pred_check_branch
      %106 = sbr.rel (0) target = $region61
    $region60: #{tpu_custom_call.1} parent=1 // pred_region
      %108 = dma.done [#allocation7], 64
    $region61: #{tpu_custom_call.1} parent=1 // pred_fallthru
      _
    // Predicated region
    $region62: #{tpu_custom_call.1} parent=1 // pred_check
      _
    $region63: #{tpu_custom_call.1} parent=1 // pred_check_branch
      %110 = sbr.rel (0) target = $region65
    $region64: #{tpu_custom_call.1} parent=1 // pred_region
      %112 = dma.done [#allocation7], 512
    $region65: #{tpu_custom_call.1} parent=1 // pred_fallthru
      _
    // Predicated region
    $region66: #{tpu_custom_call.1} parent=1 // pred_check
      _
    $region67: #{tpu_custom_call.1} parent=1 // pred_check_branch
      %114 = sbr.rel (0) target = $region69
    $region68: #{tpu_custom_call.1} parent=1 // pred_region
      %116 = dma.done [#allocation10], 256
    $region69: #{tpu_custom_call.1} parent=1 // pred_fallthru
      _
    // Predicated region
    $region70: #{tpu_custom_call.1} parent=1 // pred_check
      _
    $region71: #{tpu_custom_call.1} parent=1 // pred_check_branch
      %118 = sbr.rel (0) target = $region73
    $region72: #{tpu_custom_call.1} parent=1 // pred_region
      %120 = dma.done [#allocation10], 512
    $region73: #{tpu_custom_call.1} parent=1 // pred_fallthru
      _
    %p122 = scmp.eq.s32.totalorder 0, 0
    // Predicated region
    $region74: #{tpu_custom_call.1} parent=1 // pred_check
      %p123 = pneg %p122
    $region75: #{tpu_custom_call.1} parent=1 // pred_check_branch
      %125 = sbr.rel (%p123) target = $region77
    $region76: #{tpu_custom_call.1} parent=1 // pred_region
      %v126 = vld [vmem:[%s0] sm:$0xff]
      %v127 = vld [vmem:[#allocation6] sm:$0xf]
      %v128 = vld [vmem:[%s5] sm:$0x1]
      %v130 = vperm.slane %v128, 0
      %vm132 = vcmask 31744
      %v134 = vsel %vm132, %v126, 0
      %vm136 = vcmask 1043456
      %v138 = vsel %vm136, %v127, 0
      %140 = vmatpush.msra.mxu0 0.0
      %141 = vmatpush.msra.mxu0 0.0
      %142 = vmatpush.msra.mxu0 0.0
      %143 = vmatpush.msra.mxu0 0.0
      %144 = vmatpush.msra.mxu0 0.0
      %145 = vmatpush.msra.mxu0 0.0
      %146 = vmatpush.msra.mxu0 0.0
      %147 = vmatpush.msra.mxu0 0.0
      %148 = vmatpush.msra.mxu0 0.0
      %149 = vmatpush.msra.mxu0 0.0
      %150 = vmatpush.msra.mxu0 0.0
      %151 = vmatpush.msra.mxu0 0.0
      %152 = vmatpush.msra.mxu0 0.0
      %153 = vmatpush.msra.mxu0 0.0
      %154 = vmatpush.msra.mxu0 0.0
      %155 = vmatpush.msra.mxu0 %v138
      %156 = vmatmul.f32.gmra.mxu0 %v134
      %v157 = vpop.f32.mrf.mxu0
      %v158 = vadd.f32 %v130, %v157
      %159 = vdwg.mxu0
      %vm160 = vcmask 261120
      %161 = vst.msk [vmem:[#allocation2] sm:$0xff] %vm160, %v158
    $region77: #{tpu_custom_call.1} parent=1 // pred_fallthru
      _
    %v162 = vld [vmem:[#allocation2] sm:$0xff]
    %v163 = vpack.c.bf16 %v162, %v162
    %v164 = vld [vmem:[%s2] sm:$0x1]
    %v165 = vld [vmem:[%s6] sm:$0xf]
    %v166 = vld [vmem:[%s6 + $0x4] sm:$0xf]
    %v167 = vld [vmem:[%s6 + $0x8] sm:$0xf]
    %v168 = vld [vmem:[%s6 + $0xc] sm:$0xf]
    %v170 = vperm.slane %v164, 0
    %v176 = vunpack.c.l.b16 %v165
    %v177 = vunpack.c.l.b16 %v166
    %v178 = vunpack.c.l.b16 %v167
    %v179 = vunpack.c.l.b16 %v168
    %v180 = vpack.c.b16 %v177, %v176
    %v181 = vpack.c.b16 %v179, %v178
    %vm184 = vcmask 261120
    %v186 = vsel %vm184, %v163, 0
    %188 = vmatpush.bf16.msra.mxu0 0
    %189 = vmatpush.bf16.msra.mxu0 0
    %190 = vmatpush.bf16.msra.mxu0 0
    %191 = vmatpush.bf16.msra.mxu0 0
    %192 = vmatpush.bf16.msra.mxu0 0
    %193 = vmatpush.bf16.msra.mxu0 0
    %194 = vmatpush.bf16.msra.mxu0 %v181
    %195 = vmatpush.bf16.msra.mxu0 %v180
    %196 = vmatmul.bf16.gmra.mxu0 %v186
    %v197 = vpop.f32.mrf.mxu0
    %v198 = vadd.f32 %v170, %v197
    %v199 = vpop.f32.mrf.mxu0
    %200 = vdwg.mxu0
    %201 = vrot.lane.b32.xlu0 %v180, 96
    %v202 = vpop.permute.xlu0 %201
    %203 = vrot.lane.b32.xlu0 %v181, 96
    %v204 = vpop.permute.xlu0 %203
    %207 = vrot.lane.b32.xlu0 %v170, 96
    %v208 = vpop.permute.xlu0 %207
    %210 = vmatpush.bf16.msra.mxu0 0
    %211 = vmatpush.bf16.msra.mxu0 0
    %212 = vmatpush.bf16.msra.mxu0 0
    %213 = vmatpush.bf16.msra.mxu0 0
    %214 = vmatpush.bf16.msra.mxu0 0
    %215 = vmatpush.bf16.msra.mxu0 0
    %216 = vmatpush.bf16.msra.mxu0 %v204
    %217 = vmatpush.bf16.msra.mxu0 %v202
    %218 = vmatmul.bf16.gmra.mxu0 %v186
    %v219 = vpop.f32.mrf.mxu0
    %v220 = vadd.f32 %v208, %v219
    %v221 = vpop.f32.mrf.mxu0
    %222 = vdwg.mxu0
    %v223 = vxor.u32 %v198, 2147483648
    %v224 = vmul.f32 %v223, 1.442695
    %v225 = vpow.pop %v224
    %v226 = vadd.f32 %v225, 1.0
    %v227 = vrcp.pop %v226
    %v228 = vmul.f32 %v226, %v227
    %v229 = vsub.f32 1.0, %v228
    %v230 = vmul.f32 %v227, %v229
    %v231 = vadd.f32 %v227, %v230
    %vm232 = vweird.f32 %v226
    %vm233 = vweird.f32 %v227
    %vm234 = vmor %vm232, %vm233
    %v235 = vsel %vm234, %v227, %v231
    %v236 = vand.u32 2147483647, %v226
    %vm237 = vcmp.eq.f32.partialorder %v236, 8.507059e+37
    %v238 = vand.u32 %v226, 2147483648
    %v239 = vor.u32 1.1754944e-38, %v238
    %v240 = vsel %vm237, %v239, %v235
    %v241 = vmul.f32 1.0, %v240
    %v242 = vmul.f32 %v198, %v241
    %v243 = vtanh.pop %v220
    %v244 = vpack.c.bf16 %v242, %v242
    %v245 = vld [vmem:[#allocation8] sm:$0xf]
    %v246 = vld [vmem:[#allocation8 + $0x4] sm:$0xf]
    %v247 = vld [vmem:[#allocation8 + $0x8] sm:$0xf]
    %v248 = vld [vmem:[#allocation8 + $0xc] sm:$0xf]
    %v249 = vld [vmem:[%s8] sm:$0x1]
    %v251 = vperm.slane %v249, 0
    %v257 = vunpack.c.l.b16 %v245
    %v258 = vunpack.c.l.b16 %v246
    %v259 = vunpack.c.l.b16 %v247
    %v260 = vunpack.c.l.b16 %v248
    %v261 = vpack.c.b16 %v258, %v257
    %v262 = vpack.c.b16 %v260, %v259
    %v266 = vsel %vm184, %v244, 0
    %268 = vmatpush.bf16.msra.mxu0 0
    %269 = vmatpush.bf16.msra.mxu0 0
    %270 = vmatpush.bf16.msra.mxu0 0
    %271 = vmatpush.bf16.msra.mxu0 0
    %272 = vmatpush.bf16.msra.mxu0 0
    %273 = vmatpush.bf16.msra.mxu0 0
    %274 = vmatpush.bf16.msra.mxu0 %v262
    %275 = vmatpush.bf16.msra.mxu0 %v261
    %276 = vmatmul.bf16.gmra.mxu0 %v266
    %v277 = vpop.f32.mrf.mxu0
    %v278 = vadd.f32 %v251, %v277
    %v279 = vpop.f32.mrf.mxu0
    %280 = vdwg.mxu0
    %v281 = vxor.u32 %v278, 2147483648
    %v282 = vmul.f32 %v281, 1.442695
    %v283 = vpow.pop %v282
    %v284 = vadd.f32 %v283, 1.0
    %v285 = vrcp.pop %v284
    %v286 = vmul.f32 %v284, %v285
    %v287 = vsub.f32 1.0, %v286
    %v288 = vmul.f32 %v285, %v287
    %v289 = vadd.f32 %v285, %v288
    %vm290 = vweird.f32 %v284
    %vm291 = vweird.f32 %v285
    %vm292 = vmor %vm290, %vm291
    %v293 = vsel %vm292, %v285, %v289
    %v294 = vand.u32 2147483647, %v284
    %vm295 = vcmp.eq.f32.partialorder %v294, 8.507059e+37
    %v296 = vand.u32 %v284, 2147483648
    %v297 = vor.u32 1.1754944e-38, %v296
    %v298 = vsel %vm295, %v297, %v293
    %v299 = vmul.f32 1.0, %v298
    %v300 = vmul.f32 %v278, %v299
    %v301 = vpack.c.bf16 %v300, %v300
    %s302 = scalar_lea.vmem [#allocation8], 16
    %v303 = vld [vmem:[%s302] sm:$0xf]
    %v304 = vld [vmem:[%s302 + $0x4] sm:$0xf]
    %v305 = vld [vmem:[%s302 + $0x8] sm:$0xf]
    %v306 = vld [vmem:[%s302 + $0xc] sm:$0xf]
    %s307 = scalar_lea.vmem %s8, 1
    %v308 = vld [vmem:[%s307] sm:$0x1]
    %v310 = vperm.slane %v308, 0
    %v316 = vunpack.c.l.b16 %v303
    %v317 = vunpack.c.l.b16 %v304
    %v318 = vunpack.c.l.b16 %v305
    %v319 = vunpack.c.l.b16 %v306
    %v320 = vpack.c.b16 %v317, %v316
    %v321 = vpack.c.b16 %v319, %v318
    %v325 = vsel %vm184, %v301, 0
    %327 = vmatpush.bf16.msra.mxu0 0
    %328 = vmatpush.bf16.msra.mxu0 0
    %329 = vmatpush.bf16.msra.mxu0 0
    %330 = vmatpush.bf16.msra.mxu0 0
    %331 = vmatpush.bf16.msra.mxu0 0
    %332 = vmatpush.bf16.msra.mxu0 0
    %333 = vmatpush.bf16.msra.mxu0 %v321
    %334 = vmatpush.bf16.msra.mxu0 %v320
    %335 = vmatmul.bf16.gmra.mxu0 %v325
    %v336 = vpop.f32.mrf.mxu0
    %v337 = vadd.f32 %v310, %v336
    %v338 = vpop.f32.mrf.mxu0
    %339 = vdwg.mxu0
    %v340 = vxor.u32 %v337, 2147483648
    %v341 = vmul.f32 %v340, 1.442695
    %v342 = vpow.pop %v341
    %v343 = vadd.f32 %v342, 1.0
    %v344 = vrcp.pop %v343
    %v345 = vmul.f32 %v343, %v344
    %v346 = vsub.f32 1.0, %v345
    %v347 = vmul.f32 %v344, %v346
    %v348 = vadd.f32 %v344, %v347
    %vm349 = vweird.f32 %v343
    %vm350 = vweird.f32 %v344
    %vm351 = vmor %vm349, %vm350
    %v352 = vsel %vm351, %v344, %v348
    %v353 = vand.u32 2147483647, %v343
    %vm354 = vcmp.eq.f32.partialorder %v353, 8.507059e+37
    %v355 = vand.u32 %v343, 2147483648
    %v356 = vor.u32 1.1754944e-38, %v355
    %v357 = vsel %vm354, %v356, %v352
    %v358 = vmul.f32 1.0, %v357
    %v359 = vmul.f32 %v337, %v358
    %v360 = vpack.c.bf16 %v359, %v359
    %v361 = vld [vmem:[#allocation9] sm:$0xf]
    %v362 = vld [vmem:[#allocation9 + $0x4] sm:$0xf]
    %v363 = vld [vmem:[#allocation9 + $0x8] sm:$0xf]
    %v364 = vld [vmem:[#allocation9 + $0xc] sm:$0xf]
    %v365 = vld [vmem:[%s10] sm:$0x1]
    %v367 = vperm.slane %v365, 0
    %v373 = vunpack.c.l.b16 %v361
    %v374 = vunpack.c.l.b16 %v362
    %v375 = vunpack.c.l.b16 %v363
    %v376 = vunpack.c.l.b16 %v364
    %v377 = vpack.c.b16 %v374, %v373
    %v378 = vpack.c.b16 %v376, %v375
    %v382 = vsel %vm184, %v360, 0
    %384 = vmatpush.bf16.msra.mxu0 0
    %385 = vmatpush.bf16.msra.mxu0 0
    %386 = vmatpush.bf16.msra.mxu0 0
    %387 = vmatpush.bf16.msra.mxu0 0
    %388 = vmatpush.bf16.msra.mxu0 0
    %389 = vmatpush.bf16.msra.mxu0 0
    %390 = vmatpush.bf16.msra.mxu0 %v378
    %391 = vmatpush.bf16.msra.mxu0 %v377
    %392 = vmatmul.bf16.gmra.mxu0 %v382
    %v393 = vpop.f32.mrf.mxu0
    %v394 = vadd.f32 %v367, %v393
    %v395 = vpop.f32.mrf.mxu0
    %396 = vdwg.mxu0
    %v397 = vtanh.pop %v394
    %v398 = vld [vmem:[%s3] sm:$0x1]
    %v400 = vperm.slane %v398, 0
    %401 = vset.pattern.permute.xlu0 0
    %402 = vperm.xlu0 %401, %v400
    %v403 = vpop.permute.xlu0 %402
    %v405 = vmul.f32 %v397, %v403
    %v406 = vadd.f32 %v162, %v405
    %v407 = vld [vmem:[#allocation3] sm:$0xf]
    %v408 = vunpack.c.l.bf16 %v407
    %v409 = vmul.f32 %v243, %v408
    %v410 = vadd.f32 %v406, %v409
    %v411 = vpack.c.bf16 %v410, %v410
    %s412 = scalar_lea.vmem %s2, 1
    %v413 = vld [vmem:[%s412] sm:$0x1]
    %v415 = vperm.slane %v413, 0
    %v418 = vsel %vm184, %v411, 0
    %420 = vmatpush.bf16.msra.mxu0 0
    %421 = vmatpush.bf16.msra.mxu0 0
    %422 = vmatpush.bf16.msra.mxu0 0
    %423 = vmatpush.bf16.msra.mxu0 0
    %424 = vmatpush.bf16.msra.mxu0 0
    %425 = vmatpush.bf16.msra.mxu0 0
    %426 = vmatpush.bf16.msra.mxu0 %v181
    %427 = vmatpush.bf16.msra.mxu0 %v180
    %428 = vmatmul.bf16.gmra.mxu0 %v418
    %v429 = vpop.f32.mrf.mxu0
    %v430 = vadd.f32 %v415, %v429
    %v431 = vpop.f32.mrf.mxu0
    %432 = vdwg.mxu0
    %433 = vrot.lane.b32.xlu0 %v415, 96
    %v434 = vpop.permute.xlu0 %433
    %436 = vmatpush.bf16.msra.mxu0 0
    %437 = vmatpush.bf16.msra.mxu0 0
    %438 = vmatpush.bf16.msra.mxu0 0
    %439 = vmatpush.bf16.msra.mxu0 0
    %440 = vmatpush.bf16.msra.mxu0 0
    %441 = vmatpush.bf16.msra.mxu0 0
    %442 = vmatpush.bf16.msra.mxu0 %v204
    %443 = vmatpush.bf16.msra.mxu0 %v202
    %444 = vmatmul.bf16.gmra.mxu0 %v418
    %v445 = vpop.f32.mrf.mxu0
    %v446 = vadd.f32 %v434, %v445
    %v447 = vpop.f32.mrf.mxu0
    %448 = vdwg.mxu0
    %v449 = vxor.u32 %v430, 2147483648
    %v450 = vmul.f32 %v449, 1.442695
    %v451 = vpow.pop %v450
    %v452 = vadd.f32 %v451, 1.0
    %v453 = vrcp.pop %v452
    %v454 = vmul.f32 %v452, %v453
    %v455 = vsub.f32 1.0, %v454
    %v456 = vmul.f32 %v453, %v455
    %v457 = vadd.f32 %v453, %v456
    %vm458 = vweird.f32 %v452
    %vm459 = vweird.f32 %v453
    %vm460 = vmor %vm458, %vm459
    %v461 = vsel %vm460, %v453, %v457
    %v462 = vand.u32 2147483647, %v452
    %vm463 = vcmp.eq.f32.partialorder %v462, 8.507059e+37
    %v464 = vand.u32 %v452, 2147483648
    %v465 = vor.u32 1.1754944e-38, %v464
    %v466 = vsel %vm463, %v465, %v461
    %v467 = vmul.f32 1.0, %v466
    %v468 = vmul.f32 %v430, %v467
    %v469 = vtanh.pop %v446
    %v470 = vpack.c.bf16 %v468, %v468
    %v472 = vsel %vm184, %v470, 0
    %474 = vmatpush.bf16.msra.mxu0 0
    %475 = vmatpush.bf16.msra.mxu0 0
    %476 = vmatpush.bf16.msra.mxu0 0
    %477 = vmatpush.bf16.msra.mxu0 0
    %478 = vmatpush.bf16.msra.mxu0 0
    %479 = vmatpush.bf16.msra.mxu0 0
    %480 = vmatpush.bf16.msra.mxu0 %v262
    %481 = vmatpush.bf16.msra.mxu0 %v261
    %482 = vmatmul.bf16.gmra.mxu0 %v472
    %v483 = vpop.f32.mrf.mxu0
    %v484 = vadd.f32 %v251, %v483
    %v485 = vpop.f32.mrf.mxu0
    %486 = vdwg.mxu0
    %v487 = vxor.u32 %v484, 2147483648
    %v488 = vmul.f32 %v487, 1.442695
    %v489 = vpow.pop %v488
    %v490 = vadd.f32 %v489, 1.0
    %v491 = vrcp.pop %v490
    %v492 = vmul.f32 %v490, %v491
    %v493 = vsub.f32 1.0, %v492
    %v494 = vmul.f32 %v491, %v493
    %v495 = vadd.f32 %v491, %v494
    %vm496 = vweird.f32 %v490
    %vm497 = vweird.f32 %v491
    %vm498 = vmor %vm496, %vm497
    %v499 = vsel %vm498, %v491, %v495
    %v500 = vand.u32 2147483647, %v490
    %vm501 = vcmp.eq.f32.partialorder %v500, 8.507059e+37
    %v502 = vand.u32 %v490, 2147483648
    %v503 = vor.u32 1.1754944e-38, %v502
    %v504 = vsel %vm501, %v503, %v499
    %v505 = vmul.f32 1.0, %v504
    %v506 = vmul.f32 %v484, %v505
    %v507 = vpack.c.bf16 %v506, %v506
    %v509 = vsel %vm184, %v507, 0
    %511 = vmatpush.bf16.msra.mxu0 0
    %512 = vmatpush.bf16.msra.mxu0 0
    %513 = vmatpush.bf16.msra.mxu0 0
    %514 = vmatpush.bf16.msra.mxu0 0
    %515 = vmatpush.bf16.msra.mxu0 0
    %516 = vmatpush.bf16.msra.mxu0 0
    %517 = vmatpush.bf16.msra.mxu0 %v321
    %518 = vmatpush.bf16.msra.mxu0 %v320
    %519 = vmatmul.bf16.gmra.mxu0 %v509
    %v520 = vpop.f32.mrf.mxu0
    %v521 = vadd.f32 %v310, %v520
    %v522 = vpop.f32.mrf.mxu0
    %523 = vdwg.mxu0
    %v524 = vxor.u32 %v521, 2147483648
    %v525 = vmul.f32 %v524, 1.442695
    %v526 = vpow.pop %v525
    %v527 = vadd.f32 %v526, 1.0
    %v528 = vrcp.pop %v527
    %v529 = vmul.f32 %v527, %v528
    %v530 = vsub.f32 1.0, %v529
    %v531 = vmul.f32 %v528, %v530
    %v532 = vadd.f32 %v528, %v531
    %vm533 = vweird.f32 %v527
    %vm534 = vweird.f32 %v528
    %vm535 = vmor %vm533, %vm534
    %v536 = vsel %vm535, %v528, %v532
    %v537 = vand.u32 2147483647, %v527
    %vm538 = vcmp.eq.f32.partialorder %v537, 8.507059e+37
    %v539 = vand.u32 %v527, 2147483648
    %v540 = vor.u32 1.1754944e-38, %v539
    %v541 = vsel %vm538, %v540, %v536
    %v542 = vmul.f32 1.0, %v541
    %v543 = vmul.f32 %v521, %v542
    %v544 = vpack.c.bf16 %v543, %v543
    %v546 = vsel %vm184, %v544, 0
    %548 = vmatpush.bf16.msra.mxu0 0
    %549 = vmatpush.bf16.msra.mxu0 0
    %550 = vmatpush.bf16.msra.mxu0 0
    %551 = vmatpush.bf16.msra.mxu0 0
    %552 = vmatpush.bf16.msra.mxu0 0
    %553 = vmatpush.bf16.msra.mxu0 0
    %554 = vmatpush.bf16.msra.mxu0 %v378
    %555 = vmatpush.bf16.msra.mxu0 %v377
    %556 = vmatmul.bf16.gmra.mxu0 %v546
    %v557 = vpop.f32.mrf.mxu0
    %v558 = vadd.f32 %v367, %v557
    %v559 = vpop.f32.mrf.mxu0
    %560 = vdwg.mxu0
    %v561 = vtanh.pop %v558
    %s562 = scalar_lea.vmem %s3, 1
    %v563 = vld [vmem:[%s562] sm:$0x1]
    %v565 = vperm.slane %v563, 0
    %566 = vset.pattern.permute.xlu0 0
    %567 = vperm.xlu0 %566, %v565
    %v568 = vpop.permute.xlu0 %567
    %v570 = vmul.f32 %v561, %v568
    %v571 = vadd.f32 %v410, %v570
    %s572 = scalar_lea.vmem [#allocation3], 4
    %v573 = vld [vmem:[%s572] sm:$0xf]
    %v574 = vunpack.c.l.bf16 %v573
    %v575 = vmul.f32 %v469, %v574
    %v576 = vadd.f32 %v571, %v575
    %v577 = vpack.c.bf16 %v576, %v576
    %s578 = scalar_lea.vmem %s2, 2
    %v579 = vld [vmem:[%s578] sm:$0x1]
    %v581 = vperm.slane %v579, 0
    %v584 = vsel %vm184, %v577, 0
    %586 = vmatpush.bf16.msra.mxu0 0
    %587 = vmatpush.bf16.msra.mxu0 0
    %588 = vmatpush.bf16.msra.mxu0 0
    %589 = vmatpush.bf16.msra.mxu0 0
    %590 = vmatpush.bf16.msra.mxu0 0
    %591 = vmatpush.bf16.msra.mxu0 0
    %592 = vmatpush.bf16.msra.mxu0 %v181
    %593 = vmatpush.bf16.msra.mxu0 %v180
    %594 = vmatmul.bf16.gmra.mxu0 %v584
    %v595 = vpop.f32.mrf.mxu0
    %v596 = vadd.f32 %v581, %v595
    %v597 = vpop.f32.mrf.mxu0
    %598 = vdwg.mxu0
    %599 = vrot.lane.b32.xlu0 %v581, 96
    %v600 = vpop.permute.xlu0 %599
    %602 = vmatpush.bf16.msra.mxu0 0
    %603 = vmatpush.bf16.msra.mxu0 0
    %604 = vmatpush.bf16.msra.mxu0 0
    %605 = vmatpush.bf16.msra.mxu0 0
    %606 = vmatpush.bf16.msra.mxu0 0
    %607 = vmatpush.bf16.msra.mxu0 0
    %608 = vmatpush.bf16.msra.mxu0 %v204
    %609 = vmatpush.bf16.msra.mxu0 %v202
    %610 = vmatmul.bf16.gmra.mxu0 %v584
    %v611 = vpop.f32.mrf.mxu0
    %v612 = vadd.f32 %v600, %v611
    %v613 = vpop.f32.mrf.mxu0
    %614 = vdwg.mxu0
    %v615 = vxor.u32 %v596, 2147483648
    %v616 = vmul.f32 %v615, 1.442695
    %v617 = vpow.pop %v616
    %v618 = vadd.f32 %v617, 1.0
    %v619 = vrcp.pop %v618
    %v620 = vmul.f32 %v618, %v619
    %v621 = vsub.f32 1.0, %v620
    %v622 = vmul.f32 %v619, %v621
    %v623 = vadd.f32 %v619, %v622
    %vm624 = vweird.f32 %v618
    %vm625 = vweird.f32 %v619
    %vm626 = vmor %vm624, %vm625
    %v627 = vsel %vm626, %v619, %v623
    %v628 = vand.u32 2147483647, %v618
    %vm629 = vcmp.eq.f32.partialorder %v628, 8.507059e+37
    %v630 = vand.u32 %v618, 2147483648
    %v631 = vor.u32 1.1754944e-38, %v630
    %v632 = vsel %vm629, %v631, %v627
    %v633 = vmul.f32 1.0, %v632
    %v634 = vmul.f32 %v596, %v633
    %v635 = vtanh.pop %v612
    %v636 = vpack.c.bf16 %v634, %v634
    %v638 = vsel %vm184, %v636, 0
    %640 = vmatpush.bf16.msra.mxu0 0
    %641 = vmatpush.bf16.msra.mxu0 0
    %642 = vmatpush.bf16.msra.mxu0 0
    %643 = vmatpush.bf16.msra.mxu0 0
    %644 = vmatpush.bf16.msra.mxu0 0
    %645 = vmatpush.bf16.msra.mxu0 0
    %646 = vmatpush.bf16.msra.mxu0 %v262
    %647 = vmatpush.bf16.msra.mxu0 %v261
    %648 = vmatmul.bf16.gmra.mxu0 %v638
    %v649 = vpop.f32.mrf.mxu0
    %v650 = vadd.f32 %v251, %v649
    %v651 = vpop.f32.mrf.mxu0
    %652 = vdwg.mxu0
    %v653 = vxor.u32 %v650, 2147483648
    %v654 = vmul.f32 %v653, 1.442695
    %v655 = vpow.pop %v654
    %v656 = vadd.f32 %v655, 1.0
    %v657 = vrcp.pop %v656
    %v658 = vmul.f32 %v656, %v657
    %v659 = vsub.f32 1.0, %v658
    %v660 = vmul.f32 %v657, %v659
    %v661 = vadd.f32 %v657, %v660
    %vm662 = vweird.f32 %v656
    %vm663 = vweird.f32 %v657
    %vm664 = vmor %vm662, %vm663
    %v665 = vsel %vm664, %v657, %v661
    %v666 = vand.u32 2147483647, %v656
    %vm667 = vcmp.eq.f32.partialorder %v666, 8.507059e+37
    %v668 = vand.u32 %v656, 2147483648
    %v669 = vor.u32 1.1754944e-38, %v668
    %v670 = vsel %vm667, %v669, %v665
    %v671 = vmul.f32 1.0, %v670
    %v672 = vmul.f32 %v650, %v671
    %v673 = vpack.c.bf16 %v672, %v672
    %v675 = vsel %vm184, %v673, 0
    %677 = vmatpush.bf16.msra.mxu0 0
    %678 = vmatpush.bf16.msra.mxu0 0
    %679 = vmatpush.bf16.msra.mxu0 0
    %680 = vmatpush.bf16.msra.mxu0 0
    %681 = vmatpush.bf16.msra.mxu0 0
    %682 = vmatpush.bf16.msra.mxu0 0
    %683 = vmatpush.bf16.msra.mxu0 %v321
    %684 = vmatpush.bf16.msra.mxu0 %v320
    %685 = vmatmul.bf16.gmra.mxu0 %v675
    %v686 = vpop.f32.mrf.mxu0
    %v687 = vadd.f32 %v310, %v686
    %v688 = vpop.f32.mrf.mxu0
    %689 = vdwg.mxu0
    %v690 = vxor.u32 %v687, 2147483648
    %v691 = vmul.f32 %v690, 1.442695
    %v692 = vpow.pop %v691
    %v693 = vadd.f32 %v692, 1.0
    %v694 = vrcp.pop %v693
    %v695 = vmul.f32 %v693, %v694
    %v696 = vsub.f32 1.0, %v695
    %v697 = vmul.f32 %v694, %v696
    %v698 = vadd.f32 %v694, %v697
    %vm699 = vweird.f32 %v693
    %vm700 = vweird.f32 %v694
    %vm701 = vmor %vm699, %vm700
    %v702 = vsel %vm701, %v694, %v698
    %v703 = vand.u32 2147483647, %v693
    %vm704 = vcmp.eq.f32.partialorder %v703, 8.507059e+37
    %v705 = vand.u32 %v693, 2147483648
    %v706 = vor.u32 1.1754944e-38, %v705
    %v707 = vsel %vm704, %v706, %v702
    %v708 = vmul.f32 1.0, %v707
    %v709 = vmul.f32 %v687, %v708
    %v710 = vpack.c.bf16 %v709, %v709
    %v712 = vsel %vm184, %v710, 0
    %714 = vmatpush.bf16.msra.mxu0 0
    %715 = vmatpush.bf16.msra.mxu0 0
    %716 = vmatpush.bf16.msra.mxu0 0
    %717 = vmatpush.bf16.msra.mxu0 0
    %718 = vmatpush.bf16.msra.mxu0 0
    %719 = vmatpush.bf16.msra.mxu0 0
    %720 = vmatpush.bf16.msra.mxu0 %v378
    %721 = vmatpush.bf16.msra.mxu0 %v377
    %722 = vmatmul.bf16.gmra.mxu0 %v712
    %v723 = vpop.f32.mrf.mxu0
    %v724 = vadd.f32 %v367, %v723
    %v725 = vpop.f32.mrf.mxu0
    %726 = vdwg.mxu0
    %v727 = vtanh.pop %v724
    %s728 = scalar_lea.vmem %s3, 2
    %v729 = vld [vmem:[%s728] sm:$0x1]
    %v731 = vperm.slane %v729, 0
    %732 = vset.pattern.permute.xlu0 0
    %733 = vperm.xlu0 %732, %v731
    %v734 = vpop.permute.xlu0 %733
    %v736 = vmul.f32 %v727, %v734
    %v737 = vadd.f32 %v576, %v736
    %s738 = scalar_lea.vmem [#allocation3], 8
    %v739 = vld [vmem:[%s738] sm:$0xf]
    %v740 = vunpack.c.l.bf16 %v739
    %v741 = vmul.f32 %v635, %v740
    %v742 = vadd.f32 %v737, %v741
    %v743 = vpack.c.bf16 %v742, %v742
    %s744 = scalar_lea.vmem %s2, 3
    %v745 = vld [vmem:[%s744] sm:$0x1]
    %v747 = vperm.slane %v745, 0
    %v750 = vsel %vm184, %v743, 0
    %752 = vmatpush.bf16.msra.mxu0 0
    %753 = vmatpush.bf16.msra.mxu0 0
    %754 = vmatpush.bf16.msra.mxu0 0
    %755 = vmatpush.bf16.msra.mxu0 0
    %756 = vmatpush.bf16.msra.mxu0 0
    %757 = vmatpush.bf16.msra.mxu0 0
    %758 = vmatpush.bf16.msra.mxu0 %v181
    %759 = vmatpush.bf16.msra.mxu0 %v180
    %760 = vmatmul.bf16.gmra.mxu0 %v750
    %v761 = vpop.f32.mrf.mxu0
    %v762 = vadd.f32 %v747, %v761
    %v763 = vpop.f32.mrf.mxu0
    %764 = vdwg.mxu0
    %765 = vrot.lane.b32.xlu0 %v747, 96
    %v766 = vpop.permute.xlu0 %765
    %768 = vmatpush.bf16.msra.mxu0 0
    %769 = vmatpush.bf16.msra.mxu0 0
    %770 = vmatpush.bf16.msra.mxu0 0
    %771 = vmatpush.bf16.msra.mxu0 0
    %772 = vmatpush.bf16.msra.mxu0 0
    %773 = vmatpush.bf16.msra.mxu0 0
    %774 = vmatpush.bf16.msra.mxu0 %v204
    %775 = vmatpush.bf16.msra.mxu0 %v202
    %776 = vmatmul.bf16.gmra.mxu0 %v750
    %v777 = vpop.f32.mrf.mxu0
    %v778 = vadd.f32 %v766, %v777
    %v779 = vpop.f32.mrf.mxu0
    %780 = vdwg.mxu0
    %v781 = vxor.u32 %v762, 2147483648
    %v782 = vmul.f32 %v781, 1.442695
    %v783 = vpow.pop %v782
    %v784 = vadd.f32 %v783, 1.0
    %v785 = vrcp.pop %v784
    %v786 = vmul.f32 %v784, %v785
    %v787 = vsub.f32 1.0, %v786
    %v788 = vmul.f32 %v785, %v787
    %v789 = vadd.f32 %v785, %v788
    %vm790 = vweird.f32 %v784
    %vm791 = vweird.f32 %v785
    %vm792 = vmor %vm790, %vm791
    %v793 = vsel %vm792, %v785, %v789
    %v794 = vand.u32 2147483647, %v784
    %vm795 = vcmp.eq.f32.partialorder %v794, 8.507059e+37
    %v796 = vand.u32 %v784, 2147483648
    %v797 = vor.u32 1.1754944e-38, %v796
    %v798 = vsel %vm795, %v797, %v793
    %v799 = vmul.f32 1.0, %v798
    %v800 = vmul.f32 %v762, %v799
    %v801 = vtanh.pop %v778
    %v802 = vpack.c.bf16 %v800, %v800
    %v804 = vsel %vm184, %v802, 0
    %806 = vmatpush.bf16.msra.mxu0 0
    %807 = vmatpush.bf16.msra.mxu0 0
    %808 = vmatpush.bf16.msra.mxu0 0
    %809 = vmatpush.bf16.msra.mxu0 0
    %810 = vmatpush.bf16.msra.mxu0 0
    %811 = vmatpush.bf16.msra.mxu0 0
    %812 = vmatpush.bf16.msra.mxu0 %v262
    %813 = vmatpush.bf16.msra.mxu0 %v261
    %814 = vmatmul.bf16.gmra.mxu0 %v804
    %v815 = vpop.f32.mrf.mxu0
    %v816 = vadd.f32 %v251, %v815
    %v817 = vpop.f32.mrf.mxu0
    %818 = vdwg.mxu0
    %v819 = vxor.u32 %v816, 2147483648
    %v820 = vmul.f32 %v819, 1.442695
    %v821 = vpow.pop %v820
    %v822 = vadd.f32 %v821, 1.0
    %v823 = vrcp.pop %v822
    %v824 = vmul.f32 %v822, %v823
    %v825 = vsub.f32 1.0, %v824
    %v826 = vmul.f32 %v823, %v825
    %v827 = vadd.f32 %v823, %v826
    %vm828 = vweird.f32 %v822
    %vm829 = vweird.f32 %v823
    %vm830 = vmor %vm828, %vm829
    %v831 = vsel %vm830, %v823, %v827
    %v832 = vand.u32 2147483647, %v822
    %vm833 = vcmp.eq.f32.partialorder %v832, 8.507059e+37
    %v834 = vand.u32 %v822, 2147483648
    %v835 = vor.u32 1.1754944e-38, %v834
    %v836 = vsel %vm833, %v835, %v831
    %v837 = vmul.f32 1.0, %v836
    %v838 = vmul.f32 %v816, %v837
    %v839 = vpack.c.bf16 %v838, %v838
    %v841 = vsel %vm184, %v839, 0
    %843 = vmatpush.bf16.msra.mxu0 0
    %844 = vmatpush.bf16.msra.mxu0 0
    %845 = vmatpush.bf16.msra.mxu0 0
    %846 = vmatpush.bf16.msra.mxu0 0
    %847 = vmatpush.bf16.msra.mxu0 0
    %848 = vmatpush.bf16.msra.mxu0 0
    %849 = vmatpush.bf16.msra.mxu0 %v321
    %850 = vmatpush.bf16.msra.mxu0 %v320
    %851 = vmatmul.bf16.gmra.mxu0 %v841
    %v852 = vpop.f32.mrf.mxu0
    %v853 = vadd.f32 %v310, %v852
    %v854 = vpop.f32.mrf.mxu0
    %855 = vdwg.mxu0
    %v856 = vxor.u32 %v853, 2147483648
    %v857 = vmul.f32 %v856, 1.442695
    %v858 = vpow.pop %v857
    %v859 = vadd.f32 %v858, 1.0
    %v860 = vrcp.pop %v859
    %v861 = vmul.f32 %v859, %v860
    %v862 = vsub.f32 1.0, %v861
    %v863 = vmul.f32 %v860, %v862
    %v864 = vadd.f32 %v860, %v863
    %vm865 = vweird.f32 %v859
    %vm866 = vweird.f32 %v860
    %vm867 = vmor %vm865, %vm866
    %v868 = vsel %vm867, %v860, %v864
    %v869 = vand.u32 2147483647, %v859
    %vm870 = vcmp.eq.f32.partialorder %v869, 8.507059e+37
    %v871 = vand.u32 %v859, 2147483648
    %v872 = vor.u32 1.1754944e-38, %v871
    %v873 = vsel %vm870, %v872, %v868
    %v874 = vmul.f32 1.0, %v873
    %v875 = vmul.f32 %v853, %v874
    %v876 = vpack.c.bf16 %v875, %v875
    %v878 = vsel %vm184, %v876, 0
    %880 = vmatpush.bf16.msra.mxu0 0
    %881 = vmatpush.bf16.msra.mxu0 0
    %882 = vmatpush.bf16.msra.mxu0 0
    %883 = vmatpush.bf16.msra.mxu0 0
    %884 = vmatpush.bf16.msra.mxu0 0
    %885 = vmatpush.bf16.msra.mxu0 0
    %886 = vmatpush.bf16.msra.mxu0 %v378
    %887 = vmatpush.bf16.msra.mxu0 %v377
    %888 = vmatmul.bf16.gmra.mxu0 %v878
    %v889 = vpop.f32.mrf.mxu0
    %v890 = vadd.f32 %v367, %v889
    %v891 = vpop.f32.mrf.mxu0
    %892 = vdwg.mxu0
    %v893 = vtanh.pop %v890
    %s894 = scalar_lea.vmem %s3, 3
    %v895 = vld [vmem:[%s894] sm:$0x1]
    %v897 = vperm.slane %v895, 0
    %898 = vset.pattern.permute.xlu0 0
    %899 = vperm.xlu0 %898, %v897
    %v900 = vpop.permute.xlu0 %899
    %v902 = vmul.f32 %v893, %v900
    %v903 = vadd.f32 %v742, %v902
    %s904 = scalar_lea.vmem [#allocation3], 12
    %v905 = vld [vmem:[%s904] sm:$0xf]
    %v906 = vunpack.c.l.bf16 %v905
    %v907 = vmul.f32 %v801, %v906
    %v908 = vadd.f32 %v903, %v907
    %v909 = vpack.c.bf16 %v908, %v908
    %s910 = scalar_lea.vmem %s2, 4
    %v911 = vld [vmem:[%s910] sm:$0x1]
    %v913 = vperm.slane %v911, 0
    %v916 = vsel %vm184, %v909, 0
    %918 = vmatpush.bf16.msra.mxu0 0
    %919 = vmatpush.bf16.msra.mxu0 0
    %920 = vmatpush.bf16.msra.mxu0 0
    %921 = vmatpush.bf16.msra.mxu0 0
    %922 = vmatpush.bf16.msra.mxu0 0
    %923 = vmatpush.bf16.msra.mxu0 0
    %924 = vmatpush.bf16.msra.mxu0 %v181
    %925 = vmatpush.bf16.msra.mxu0 %v180
    %926 = vmatmul.bf16.gmra.mxu0 %v916
    %v927 = vpop.f32.mrf.mxu0
    %v928 = vadd.f32 %v913, %v927
    %v929 = vpop.f32.mrf.mxu0
    %930 = vdwg.mxu0
    %931 = vrot.lane.b32.xlu0 %v913, 96
    %v932 = vpop.permute.xlu0 %931
    %934 = vmatpush.bf16.msra.mxu0 0
    %935 = vmatpush.bf16.msra.mxu0 0
    %936 = vmatpush.bf16.msra.mxu0 0
    %937 = vmatpush.bf16.msra.mxu0 0
    %938 = vmatpush.bf16.msra.mxu0 0
    %939 = vmatpush.bf16.msra.mxu0 0
    %940 = vmatpush.bf16.msra.mxu0 %v204
    %941 = vmatpush.bf16.msra.mxu0 %v202
    %942 = vmatmul.bf16.gmra.mxu0 %v916
    %v943 = vpop.f32.mrf.mxu0
    %v944 = vadd.f32 %v932, %v943
    %v945 = vpop.f32.mrf.mxu0
    %946 = vdwg.mxu0
    %v947 = vxor.u32 %v928, 2147483648
    %v948 = vmul.f32 %v947, 1.442695
    %v949 = vpow.pop %v948
    %v950 = vadd.f32 %v949, 1.0
    %v951 = vrcp.pop %v950
    %v952 = vmul.f32 %v950, %v951
    %v953 = vsub.f32 1.0, %v952
    %v954 = vmul.f32 %v951, %v953
    %v955 = vadd.f32 %v951, %v954
    %vm956 = vweird.f32 %v950
    %vm957 = vweird.f32 %v951
    %vm958 = vmor %vm956, %vm957
    %v959 = vsel %vm958, %v951, %v955
    %v960 = vand.u32 2147483647, %v950
    %vm961 = vcmp.eq.f32.partialorder %v960, 8.507059e+37
    %v962 = vand.u32 %v950, 2147483648
    %v963 = vor.u32 1.1754944e-38, %v962
    %v964 = vsel %vm961, %v963, %v959
    %v965 = vmul.f32 1.0, %v964
    %v966 = vmul.f32 %v928, %v965
    %v967 = vtanh.pop %v944
    %v968 = vpack.c.bf16 %v966, %v966
    %v970 = vsel %vm184, %v968, 0
    %972 = vmatpush.bf16.msra.mxu0 0
    %973 = vmatpush.bf16.msra.mxu0 0
    %974 = vmatpush.bf16.msra.mxu0 0
    %975 = vmatpush.bf16.msra.mxu0 0
    %976 = vmatpush.bf16.msra.mxu0 0
    %977 = vmatpush.bf16.msra.mxu0 0
    %978 = vmatpush.bf16.msra.mxu0 %v262
    %979 = vmatpush.bf16.msra.mxu0 %v261
    %980 = vmatmul.bf16.gmra.mxu0 %v970
    %v981 = vpop.f32.mrf.mxu0
    %v982 = vadd.f32 %v251, %v981
    %v983 = vpop.f32.mrf.mxu0
    %984 = vdwg.mxu0
    %v985 = vxor.u32 %v982, 2147483648
    %v986 = vmul.f32 %v985, 1.442695
    %v987 = vpow.pop %v986
    %v988 = vadd.f32 %v987, 1.0
    %v989 = vrcp.pop %v988
    %v990 = vmul.f32 %v988, %v989
    %v991 = vsub.f32 1.0, %v990
    %v992 = vmul.f32 %v989, %v991
    %v993 = vadd.f32 %v989, %v992
    %vm994 = vweird.f32 %v988
    %vm995 = vweird.f32 %v989
    %vm996 = vmor %vm994, %vm995
    %v997 = vsel %vm996, %v989, %v993
    %v998 = vand.u32 2147483647, %v988
    %vm999 = vcmp.eq.f32.partialorder %v998, 8.507059e+37
    %v1000 = vand.u32 %v988, 2147483648
    %v1001 = vor.u32 1.1754944e-38, %v1000
    %v1002 = vsel %vm999, %v1001, %v997
    %v1003 = vmul.f32 1.0, %v1002
    %v1004 = vmul.f32 %v982, %v1003
    %v1005 = vpack.c.bf16 %v1004, %v1004
    %v1007 = vsel %vm184, %v1005, 0
    %1009 = vmatpush.bf16.msra.mxu0 0
    %1010 = vmatpush.bf16.msra.mxu0 0
    %1011 = vmatpush.bf16.msra.mxu0 0
    %1012 = vmatpush.bf16.msra.mxu0 0
    %1013 = vmatpush.bf16.msra.mxu0 0
    %1014 = vmatpush.bf16.msra.mxu0 0
    %1015 = vmatpush.bf16.msra.mxu0 %v321
    %1016 = vmatpush.bf16.msra.mxu0 %v320
    %1017 = vmatmul.bf16.gmra.mxu0 %v1007
    %v1018 = vpop.f32.mrf.mxu0
    %v1019 = vadd.f32 %v310, %v1018
    %v1020 = vpop.f32.mrf.mxu0
    %1021 = vdwg.mxu0
    %v1022 = vxor.u32 %v1019, 2147483648
    %v1023 = vmul.f32 %v1022, 1.442695
    %v1024 = vpow.pop %v1023
    %v1025 = vadd.f32 %v1024, 1.0
    %v1026 = vrcp.pop %v1025
    %v1027 = vmul.f32 %v1025, %v1026
    %v1028 = vsub.f32 1.0, %v1027
    %v1029 = vmul.f32 %v1026, %v1028
    %v1030 = vadd.f32 %v1026, %v1029
    %vm1031 = vweird.f32 %v1025
    %vm1032 = vweird.f32 %v1026
    %vm1033 = vmor %vm1031, %vm1032
    %v1034 = vsel %vm1033, %v1026, %v1030
    %v1035 = vand.u32 2147483647, %v1025
    %vm1036 = vcmp.eq.f32.partialorder %v1035, 8.507059e+37
    %v1037 = vand.u32 %v1025, 2147483648
    %v1038 = vor.u32 1.1754944e-38, %v1037
    %v1039 = vsel %vm1036, %v1038, %v1034
    %v1040 = vmul.f32 1.0, %v1039
    %v1041 = vmul.f32 %v1019, %v1040
    %v1042 = vpack.c.bf16 %v1041, %v1041
    %v1044 = vsel %vm184, %v1042, 0
    %1046 = vmatpush.bf16.msra.mxu0 0
    %1047 = vmatpush.bf16.msra.mxu0 0
    %1048 = vmatpush.bf16.msra.mxu0 0
    %1049 = vmatpush.bf16.msra.mxu0 0
    %1050 = vmatpush.bf16.msra.mxu0 0
    %1051 = vmatpush.bf16.msra.mxu0 0
    %1052 = vmatpush.bf16.msra.mxu0 %v378
    %1053 = vmatpush.bf16.msra.mxu0 %v377
    %1054 = vmatmul.bf16.gmra.mxu0 %v1044
    %v1055 = vpop.f32.mrf.mxu0
    %v1056 = vadd.f32 %v367, %v1055
    %v1057 = vpop.f32.mrf.mxu0
    %1058 = vdwg.mxu0
    %v1059 = vtanh.pop %v1056
    %s1060 = scalar_lea.vmem %s3, 4
    %v1061 = vld [vmem:[%s1060] sm:$0x1]
    %v1063 = vperm.slane %v1061, 0
    %1064 = vset.pattern.permute.xlu0 0
    %1065 = vperm.xlu0 %1064, %v1063
    %v1066 = vpop.permute.xlu0 %1065
    %v1068 = vmul.f32 %v1059, %v1066
    %v1069 = vadd.f32 %v908, %v1068
    %s1070 = scalar_lea.vmem [#allocation3], 16
    %v1071 = vld [vmem:[%s1070] sm:$0xf]
    %v1072 = vunpack.c.l.bf16 %v1071
    %v1073 = vmul.f32 %v967, %v1072
    %v1074 = vadd.f32 %v1069, %v1073
    %v1075 = vpack.c.bf16 %v1074, %v1074
    %s1076 = scalar_lea.vmem %s2, 5
    %v1077 = vld [vmem:[%s1076] sm:$0x1]
    %v1079 = vperm.slane %v1077, 0
    %v1082 = vsel %vm184, %v1075, 0
    %1084 = vmatpush.bf16.msra.mxu0 0
    %1085 = vmatpush.bf16.msra.mxu0 0
    %1086 = vmatpush.bf16.msra.mxu0 0
    %1087 = vmatpush.bf16.msra.mxu0 0
    %1088 = vmatpush.bf16.msra.mxu0 0
    %1089 = vmatpush.bf16.msra.mxu0 0
    %1090 = vmatpush.bf16.msra.mxu0 %v181
    %1091 = vmatpush.bf16.msra.mxu0 %v180
    %1092 = vmatmul.bf16.gmra.mxu0 %v1082
    %v1093 = vpop.f32.mrf.mxu0
    %v1094 = vadd.f32 %v1079, %v1093
    %v1095 = vpop.f32.mrf.mxu0
    %1096 = vdwg.mxu0
    %1097 = vrot.lane.b32.xlu0 %v1079, 96
    %v1098 = vpop.permute.xlu0 %1097
    %1100 = vmatpush.bf16.msra.mxu0 0
    %1101 = vmatpush.bf16.msra.mxu0 0
    %1102 = vmatpush.bf16.msra.mxu0 0
    %1103 = vmatpush.bf16.msra.mxu0 0
    %1104 = vmatpush.bf16.msra.mxu0 0
    %1105 = vmatpush.bf16.msra.mxu0 0
    %1106 = vmatpush.bf16.msra.mxu0 %v204
    %1107 = vmatpush.bf16.msra.mxu0 %v202
    %1108 = vmatmul.bf16.gmra.mxu0 %v1082
    %v1109 = vpop.f32.mrf.mxu0
    %v1110 = vadd.f32 %v1098, %v1109
    %v1111 = vpop.f32.mrf.mxu0
    %1112 = vdwg.mxu0
    %v1113 = vxor.u32 %v1094, 2147483648
    %v1114 = vmul.f32 %v1113, 1.442695
    %v1115 = vpow.pop %v1114
    %v1116 = vadd.f32 %v1115, 1.0
    %v1117 = vrcp.pop %v1116
    %v1118 = vmul.f32 %v1116, %v1117
    %v1119 = vsub.f32 1.0, %v1118
    %v1120 = vmul.f32 %v1117, %v1119
    %v1121 = vadd.f32 %v1117, %v1120
    %vm1122 = vweird.f32 %v1116
    %vm1123 = vweird.f32 %v1117
    %vm1124 = vmor %vm1122, %vm1123
    %v1125 = vsel %vm1124, %v1117, %v1121
    %v1126 = vand.u32 2147483647, %v1116
    %vm1127 = vcmp.eq.f32.partialorder %v1126, 8.507059e+37
    %v1128 = vand.u32 %v1116, 2147483648
    %v1129 = vor.u32 1.1754944e-38, %v1128
    %v1130 = vsel %vm1127, %v1129, %v1125
    %v1131 = vmul.f32 1.0, %v1130
    %v1132 = vmul.f32 %v1094, %v1131
    %v1133 = vtanh.pop %v1110
    %v1134 = vpack.c.bf16 %v1132, %v1132
    %v1136 = vsel %vm184, %v1134, 0
    %1138 = vmatpush.bf16.msra.mxu0 0
    %1139 = vmatpush.bf16.msra.mxu0 0
    %1140 = vmatpush.bf16.msra.mxu0 0
    %1141 = vmatpush.bf16.msra.mxu0 0
    %1142 = vmatpush.bf16.msra.mxu0 0
    %1143 = vmatpush.bf16.msra.mxu0 0
    %1144 = vmatpush.bf16.msra.mxu0 %v262
    %1145 = vmatpush.bf16.msra.mxu0 %v261
    %1146 = vmatmul.bf16.gmra.mxu0 %v1136
    %v1147 = vpop.f32.mrf.mxu0
    %v1148 = vadd.f32 %v251, %v1147
    %v1149 = vpop.f32.mrf.mxu0
    %1150 = vdwg.mxu0
    %v1151 = vxor.u32 %v1148, 2147483648
    %v1152 = vmul.f32 %v1151, 1.442695
    %v1153 = vpow.pop %v1152
    %v1154 = vadd.f32 %v1153, 1.0
    %v1155 = vrcp.pop %v1154
    %v1156 = vmul.f32 %v1154, %v1155
    %v1157 = vsub.f32 1.0, %v1156
    %v1158 = vmul.f32 %v1155, %v1157
    %v1159 = vadd.f32 %v1155, %v1158
    %vm1160 = vweird.f32 %v1154
    %vm1161 = vweird.f32 %v1155
    %vm1162 = vmor %vm1160, %vm1161
    %v1163 = vsel %vm1162, %v1155, %v1159
    %v1164 = vand.u32 2147483647, %v1154
    %vm1165 = vcmp.eq.f32.partialorder %v1164, 8.507059e+37
    %v1166 = vand.u32 %v1154, 2147483648
    %v1167 = vor.u32 1.1754944e-38, %v1166
    %v1168 = vsel %vm1165, %v1167, %v1163
    %v1169 = vmul.f32 1.0, %v1168
    %v1170 = vmul.f32 %v1148, %v1169
    %v1171 = vpack.c.bf16 %v1170, %v1170
    %v1173 = vsel %vm184, %v1171, 0
    %1175 = vmatpush.bf16.msra.mxu0 0
    %1176 = vmatpush.bf16.msra.mxu0 0
    %1177 = vmatpush.bf16.msra.mxu0 0
    %1178 = vmatpush.bf16.msra.mxu0 0
    %1179 = vmatpush.bf16.msra.mxu0 0
    %1180 = vmatpush.bf16.msra.mxu0 0
    %1181 = vmatpush.bf16.msra.mxu0 %v321
    %1182 = vmatpush.bf16.msra.mxu0 %v320
    %1183 = vmatmul.bf16.gmra.mxu0 %v1173
    %v1184 = vpop.f32.mrf.mxu0
    %v1185 = vadd.f32 %v310, %v1184
    %v1186 = vpop.f32.mrf.mxu0
    %1187 = vdwg.mxu0
    %v1188 = vxor.u32 %v1185, 2147483648
    %v1189 = vmul.f32 %v1188, 1.442695
    %v1190 = vpow.pop %v1189
    %v1191 = vadd.f32 %v1190, 1.0
    %v1192 = vrcp.pop %v1191
    %v1193 = vmul.f32 %v1191, %v1192
    %v1194 = vsub.f32 1.0, %v1193
    %v1195 = vmul.f32 %v1192, %v1194
    %v1196 = vadd.f32 %v1192, %v1195
    %vm1197 = vweird.f32 %v1191
    %vm1198 = vweird.f32 %v1192
    %vm1199 = vmor %vm1197, %vm1198
    %v1200 = vsel %vm1199, %v1192, %v1196
    %v1201 = vand.u32 2147483647, %v1191
    %vm1202 = vcmp.eq.f32.partialorder %v1201, 8.507059e+37
    %v1203 = vand.u32 %v1191, 2147483648
    %v1204 = vor.u32 1.1754944e-38, %v1203
    %v1205 = vsel %vm1202, %v1204, %v1200
    %v1206 = vmul.f32 1.0, %v1205
    %v1207 = vmul.f32 %v1185, %v1206
    %v1208 = vpack.c.bf16 %v1207, %v1207
    %v1210 = vsel %vm184, %v1208, 0
    %1212 = vmatpush.bf16.msra.mxu0 0
    %1213 = vmatpush.bf16.msra.mxu0 0
    %1214 = vmatpush.bf16.msra.mxu0 0
    %1215 = vmatpush.bf16.msra.mxu0 0
    %1216 = vmatpush.bf16.msra.mxu0 0
    %1217 = vmatpush.bf16.msra.mxu0 0
    %1218 = vmatpush.bf16.msra.mxu0 %v378
    %1219 = vmatpush.bf16.msra.mxu0 %v377
    %1220 = vmatmul.bf16.gmra.mxu0 %v1210
    %v1221 = vpop.f32.mrf.mxu0
    %v1222 = vadd.f32 %v367, %v1221
    %v1223 = vpop.f32.mrf.mxu0
    %1224 = vdwg.mxu0
    %v1225 = vtanh.pop %v1222
    %s1226 = scalar_lea.vmem %s3, 5
    %v1227 = vld [vmem:[%s1226] sm:$0x1]
    %v1229 = vperm.slane %v1227, 0
    %1230 = vset.pattern.permute.xlu0 0
    %1231 = vperm.xlu0 %1230, %v1229
    %v1232 = vpop.permute.xlu0 %1231
    %v1234 = vmul.f32 %v1225, %v1232
    %v1235 = vadd.f32 %v1074, %v1234
    %s1236 = scalar_lea.vmem [#allocation3], 20
    %v1237 = vld [vmem:[%s1236] sm:$0xf]
    %v1238 = vunpack.c.l.bf16 %v1237
    %v1239 = vmul.f32 %v1133, %v1238
    %v1240 = vadd.f32 %v1235, %v1239
    %v1241 = vpack.c.bf16 %v1240, %v1240
    %s1242 = scalar_lea.vmem %s2, 6
    %v1243 = vld [vmem:[%s1242] sm:$0x1]
    %v1245 = vperm.slane %v1243, 0
    %v1248 = vsel %vm184, %v1241, 0
    %1250 = vmatpush.bf16.msra.mxu0 0
    %1251 = vmatpush.bf16.msra.mxu0 0
    %1252 = vmatpush.bf16.msra.mxu0 0
    %1253 = vmatpush.bf16.msra.mxu0 0
    %1254 = vmatpush.bf16.msra.mxu0 0
    %1255 = vmatpush.bf16.msra.mxu0 0
    %1256 = vmatpush.bf16.msra.mxu0 %v181
    %1257 = vmatpush.bf16.msra.mxu0 %v180
    %1258 = vmatmul.bf16.gmra.mxu0 %v1248
    %v1259 = vpop.f32.mrf.mxu0
    %v1260 = vadd.f32 %v1245, %v1259
    %v1261 = vpop.f32.mrf.mxu0
    %1262 = vdwg.mxu0
    %1263 = vrot.lane.b32.xlu0 %v1245, 96
    %v1264 = vpop.permute.xlu0 %1263
    %1266 = vmatpush.bf16.msra.mxu0 0
    %1267 = vmatpush.bf16.msra.mxu0 0
    %1268 = vmatpush.bf16.msra.mxu0 0
    %1269 = vmatpush.bf16.msra.mxu0 0
    %1270 = vmatpush.bf16.msra.mxu0 0
    %1271 = vmatpush.bf16.msra.mxu0 0
    %1272 = vmatpush.bf16.msra.mxu0 %v204
    %1273 = vmatpush.bf16.msra.mxu0 %v202
    %1274 = vmatmul.bf16.gmra.mxu0 %v1248
    %v1275 = vpop.f32.mrf.mxu0
    %v1276 = vadd.f32 %v1264, %v1275
    %v1277 = vpop.f32.mrf.mxu0
    %1278 = vdwg.mxu0
    %v1279 = vxor.u32 %v1260, 2147483648
    %v1280 = vmul.f32 %v1279, 1.442695
    %v1281 = vpow.pop %v1280
    %v1282 = vadd.f32 %v1281, 1.0
    %v1283 = vrcp.pop %v1282
    %v1284 = vmul.f32 %v1282, %v1283
    %v1285 = vsub.f32 1.0, %v1284
    %v1286 = vmul.f32 %v1283, %v1285
    %v1287 = vadd.f32 %v1283, %v1286
    %vm1288 = vweird.f32 %v1282
    %vm1289 = vweird.f32 %v1283
    %vm1290 = vmor %vm1288, %vm1289
    %v1291 = vsel %vm1290, %v1283, %v1287
    %v1292 = vand.u32 2147483647, %v1282
    %vm1293 = vcmp.eq.f32.partialorder %v1292, 8.507059e+37
    %v1294 = vand.u32 %v1282, 2147483648
    %v1295 = vor.u32 1.1754944e-38, %v1294
    %v1296 = vsel %vm1293, %v1295, %v1291
    %v1297 = vmul.f32 1.0, %v1296
    %v1298 = vmul.f32 %v1260, %v1297
    %v1299 = vtanh.pop %v1276
    %v1300 = vpack.c.bf16 %v1298, %v1298
    %v1302 = vsel %vm184, %v1300, 0
    %1304 = vmatpush.bf16.msra.mxu0 0
    %1305 = vmatpush.bf16.msra.mxu0 0
    %1306 = vmatpush.bf16.msra.mxu0 0
    %1307 = vmatpush.bf16.msra.mxu0 0
    %1308 = vmatpush.bf16.msra.mxu0 0
    %1309 = vmatpush.bf16.msra.mxu0 0
    %1310 = vmatpush.bf16.msra.mxu0 %v262
    %1311 = vmatpush.bf16.msra.mxu0 %v261
    %1312 = vmatmul.bf16.gmra.mxu0 %v1302
    %v1313 = vpop.f32.mrf.mxu0
    %v1314 = vadd.f32 %v251, %v1313
    %v1315 = vpop.f32.mrf.mxu0
    %1316 = vdwg.mxu0
    %v1317 = vxor.u32 %v1314, 2147483648
    %v1318 = vmul.f32 %v1317, 1.442695
    %v1319 = vpow.pop %v1318
    %v1320 = vadd.f32 %v1319, 1.0
    %v1321 = vrcp.pop %v1320
    %v1322 = vmul.f32 %v1320, %v1321
    %v1323 = vsub.f32 1.0, %v1322
    %v1324 = vmul.f32 %v1321, %v1323
    %v1325 = vadd.f32 %v1321, %v1324
    %vm1326 = vweird.f32 %v1320
    %vm1327 = vweird.f32 %v1321
    %vm1328 = vmor %vm1326, %vm1327
    %v1329 = vsel %vm1328, %v1321, %v1325
    %v1330 = vand.u32 2147483647, %v1320
    %vm1331 = vcmp.eq.f32.partialorder %v1330, 8.507059e+37
    %v1332 = vand.u32 %v1320, 2147483648
    %v1333 = vor.u32 1.1754944e-38, %v1332
    %v1334 = vsel %vm1331, %v1333, %v1329
    %v1335 = vmul.f32 1.0, %v1334
    %v1336 = vmul.f32 %v1314, %v1335
    %v1337 = vpack.c.bf16 %v1336, %v1336
    %v1339 = vsel %vm184, %v1337, 0
    %1341 = vmatpush.bf16.msra.mxu0 0
    %1342 = vmatpush.bf16.msra.mxu0 0
    %1343 = vmatpush.bf16.msra.mxu0 0
    %1344 = vmatpush.bf16.msra.mxu0 0
    %1345 = vmatpush.bf16.msra.mxu0 0
    %1346 = vmatpush.bf16.msra.mxu0 0
    %1347 = vmatpush.bf16.msra.mxu0 %v321
    %1348 = vmatpush.bf16.msra.mxu0 %v320
    %1349 = vmatmul.bf16.gmra.mxu0 %v1339
    %v1350 = vpop.f32.mrf.mxu0
    %v1351 = vadd.f32 %v310, %v1350
    %v1352 = vpop.f32.mrf.mxu0
    %1353 = vdwg.mxu0
    %v1354 = vxor.u32 %v1351, 2147483648
    %v1355 = vmul.f32 %v1354, 1.442695
    %v1356 = vpow.pop %v1355
    %v1357 = vadd.f32 %v1356, 1.0
    %v1358 = vrcp.pop %v1357
    %v1359 = vmul.f32 %v1357, %v1358
    %v1360 = vsub.f32 1.0, %v1359
    %v1361 = vmul.f32 %v1358, %v1360
    %v1362 = vadd.f32 %v1358, %v1361
    %vm1363 = vweird.f32 %v1357
    %vm1364 = vweird.f32 %v1358
    %vm1365 = vmor %vm1363, %vm1364
    %v1366 = vsel %vm1365, %v1358, %v1362
    %v1367 = vand.u32 2147483647, %v1357
    %vm1368 = vcmp.eq.f32.partialorder %v1367, 8.507059e+37
    %v1369 = vand.u32 %v1357, 2147483648
    %v1370 = vor.u32 1.1754944e-38, %v1369
    %v1371 = vsel %vm1368, %v1370, %v1366
    %v1372 = vmul.f32 1.0, %v1371
    %v1373 = vmul.f32 %v1351, %v1372
    %v1374 = vpack.c.bf16 %v1373, %v1373
    %v1376 = vsel %vm184, %v1374, 0
    %1378 = vmatpush.bf16.msra.mxu0 0
    %1379 = vmatpush.bf16.msra.mxu0 0
    %1380 = vmatpush.bf16.msra.mxu0 0
    %1381 = vmatpush.bf16.msra.mxu0 0
    %1382 = vmatpush.bf16.msra.mxu0 0
    %1383 = vmatpush.bf16.msra.mxu0 0
    %1384 = vmatpush.bf16.msra.mxu0 %v378
    %1385 = vmatpush.bf16.msra.mxu0 %v377
    %1386 = vmatmul.bf16.gmra.mxu0 %v1376
    %v1387 = vpop.f32.mrf.mxu0
    %v1388 = vadd.f32 %v367, %v1387
    %v1389 = vpop.f32.mrf.mxu0
    %1390 = vdwg.mxu0
    %v1391 = vtanh.pop %v1388
    %s1392 = scalar_lea.vmem %s3, 6
    %v1393 = vld [vmem:[%s1392] sm:$0x1]
    %v1395 = vperm.slane %v1393, 0
    %1396 = vset.pattern.permute.xlu0 0
    %1397 = vperm.xlu0 %1396, %v1395
    %v1398 = vpop.permute.xlu0 %1397
    %v1400 = vmul.f32 %v1391, %v1398
    %v1401 = vadd.f32 %v1240, %v1400
    %s1402 = scalar_lea.vmem [#allocation3], 24
    %v1403 = vld [vmem:[%s1402] sm:$0xf]
    %v1404 = vunpack.c.l.bf16 %v1403
    %v1405 = vmul.f32 %v1299, %v1404
    %v1406 = vadd.f32 %v1401, %v1405
    %v1407 = vpack.c.bf16 %v1406, %v1406
    %s1408 = scalar_lea.vmem %s2, 7
    %v1409 = vld [vmem:[%s1408] sm:$0x1]
    %v1411 = vperm.slane %v1409, 0
    %v1414 = vsel %vm184, %v1407, 0
    %1416 = vmatpush.bf16.msra.mxu0 0
    %1417 = vmatpush.bf16.msra.mxu0 0
    %1418 = vmatpush.bf16.msra.mxu0 0
    %1419 = vmatpush.bf16.msra.mxu0 0
    %1420 = vmatpush.bf16.msra.mxu0 0
    %1421 = vmatpush.bf16.msra.mxu0 0
    %1422 = vmatpush.bf16.msra.mxu0 %v181
    %1423 = vmatpush.bf16.msra.mxu0 %v180
    %1424 = vmatmul.bf16.gmra.mxu0 %v1414
    %v1425 = vpop.f32.mrf.mxu0
    %v1426 = vadd.f32 %v1411, %v1425
    %v1427 = vpop.f32.mrf.mxu0
    %1428 = vdwg.mxu0
    %1429 = vrot.lane.b32.xlu0 %v1411, 96
    %v1430 = vpop.permute.xlu0 %1429
    %1432 = vmatpush.bf16.msra.mxu0 0
    %1433 = vmatpush.bf16.msra.mxu0 0
    %1434 = vmatpush.bf16.msra.mxu0 0
    %1435 = vmatpush.bf16.msra.mxu0 0
    %1436 = vmatpush.bf16.msra.mxu0 0
    %1437 = vmatpush.bf16.msra.mxu0 0
    %1438 = vmatpush.bf16.msra.mxu0 %v204
    %1439 = vmatpush.bf16.msra.mxu0 %v202
    %1440 = vmatmul.bf16.gmra.mxu0 %v1414
    %v1441 = vpop.f32.mrf.mxu0
    %v1442 = vadd.f32 %v1430, %v1441
    %v1443 = vpop.f32.mrf.mxu0
    %1444 = vdwg.mxu0
    %v1445 = vxor.u32 %v1426, 2147483648
    %v1446 = vmul.f32 %v1445, 1.442695
    %v1447 = vpow.pop %v1446
    %v1448 = vadd.f32 %v1447, 1.0
    %v1449 = vrcp.pop %v1448
    %v1450 = vmul.f32 %v1448, %v1449
    %v1451 = vsub.f32 1.0, %v1450
    %v1452 = vmul.f32 %v1449, %v1451
    %v1453 = vadd.f32 %v1449, %v1452
    %vm1454 = vweird.f32 %v1448
    %vm1455 = vweird.f32 %v1449
    %vm1456 = vmor %vm1454, %vm1455
    %v1457 = vsel %vm1456, %v1449, %v1453
    %v1458 = vand.u32 2147483647, %v1448
    %vm1459 = vcmp.eq.f32.partialorder %v1458, 8.507059e+37
    %v1460 = vand.u32 %v1448, 2147483648
    %v1461 = vor.u32 1.1754944e-38, %v1460
    %v1462 = vsel %vm1459, %v1461, %v1457
    %v1463 = vmul.f32 1.0, %v1462
    %v1464 = vmul.f32 %v1426, %v1463
    %v1465 = vtanh.pop %v1442
    %v1466 = vpack.c.bf16 %v1464, %v1464
    %v1468 = vsel %vm184, %v1466, 0
    %1470 = vmatpush.bf16.msra.mxu0 0
    %1471 = vmatpush.bf16.msra.mxu0 0
    %1472 = vmatpush.bf16.msra.mxu0 0
    %1473 = vmatpush.bf16.msra.mxu0 0
    %1474 = vmatpush.bf16.msra.mxu0 0
    %1475 = vmatpush.bf16.msra.mxu0 0
    %1476 = vmatpush.bf16.msra.mxu0 %v262
    %1477 = vmatpush.bf16.msra.mxu0 %v261
    %1478 = vmatmul.bf16.gmra.mxu0 %v1468
    %v1479 = vpop.f32.mrf.mxu0
    %v1480 = vadd.f32 %v251, %v1479
    %v1481 = vpop.f32.mrf.mxu0
    %1482 = vdwg.mxu0
    %v1483 = vxor.u32 %v1480, 2147483648
    %v1484 = vmul.f32 %v1483, 1.442695
    %v1485 = vpow.pop %v1484
    %v1486 = vadd.f32 %v1485, 1.0
    %v1487 = vrcp.pop %v1486
    %v1488 = vmul.f32 %v1486, %v1487
    %v1489 = vsub.f32 1.0, %v1488
    %v1490 = vmul.f32 %v1487, %v1489
    %v1491 = vadd.f32 %v1487, %v1490
    %vm1492 = vweird.f32 %v1486
    %vm1493 = vweird.f32 %v1487
    %vm1494 = vmor %vm1492, %vm1493
    %v1495 = vsel %vm1494, %v1487, %v1491
    %v1496 = vand.u32 2147483647, %v1486
    %vm1497 = vcmp.eq.f32.partialorder %v1496, 8.507059e+37
    %v1498 = vand.u32 %v1486, 2147483648
    %v1499 = vor.u32 1.1754944e-38, %v1498
    %v1500 = vsel %vm1497, %v1499, %v1495
    %v1501 = vmul.f32 1.0, %v1500
    %v1502 = vmul.f32 %v1480, %v1501
    %v1503 = vpack.c.bf16 %v1502, %v1502
    %v1505 = vsel %vm184, %v1503, 0
    %1507 = vmatpush.bf16.msra.mxu0 0
    %1508 = vmatpush.bf16.msra.mxu0 0
    %1509 = vmatpush.bf16.msra.mxu0 0
    %1510 = vmatpush.bf16.msra.mxu0 0
    %1511 = vmatpush.bf16.msra.mxu0 0
    %1512 = vmatpush.bf16.msra.mxu0 0
    %1513 = vmatpush.bf16.msra.mxu0 %v321
    %1514 = vmatpush.bf16.msra.mxu0 %v320
    %1515 = vmatmul.bf16.gmra.mxu0 %v1505
    %v1516 = vpop.f32.mrf.mxu0
    %v1517 = vadd.f32 %v310, %v1516
    %v1518 = vpop.f32.mrf.mxu0
    %1519 = vdwg.mxu0
    %v1520 = vxor.u32 %v1517, 2147483648
    %v1521 = vmul.f32 %v1520, 1.442695
    %v1522 = vpow.pop %v1521
    %v1523 = vadd.f32 %v1522, 1.0
    %v1524 = vrcp.pop %v1523
    %v1525 = vmul.f32 %v1523, %v1524
    %v1526 = vsub.f32 1.0, %v1525
    %v1527 = vmul.f32 %v1524, %v1526
    %v1528 = vadd.f32 %v1524, %v1527
    %vm1529 = vweird.f32 %v1523
    %vm1530 = vweird.f32 %v1524
    %vm1531 = vmor %vm1529, %vm1530
    %v1532 = vsel %vm1531, %v1524, %v1528
    %v1533 = vand.u32 2147483647, %v1523
    %vm1534 = vcmp.eq.f32.partialorder %v1533, 8.507059e+37
    %v1535 = vand.u32 %v1523, 2147483648
    %v1536 = vor.u32 1.1754944e-38, %v1535
    %v1537 = vsel %vm1534, %v1536, %v1532
    %v1538 = vmul.f32 1.0, %v1537
    %v1539 = vmul.f32 %v1517, %v1538
    %v1540 = vpack.c.bf16 %v1539, %v1539
    %v1542 = vsel %vm184, %v1540, 0
    %1544 = vmatpush.bf16.msra.mxu0 0
    %1545 = vmatpush.bf16.msra.mxu0 0
    %1546 = vmatpush.bf16.msra.mxu0 0
    %1547 = vmatpush.bf16.msra.mxu0 0
    %1548 = vmatpush.bf16.msra.mxu0 0
    %1549 = vmatpush.bf16.msra.mxu0 0
    %1550 = vmatpush.bf16.msra.mxu0 %v378
    %1551 = vmatpush.bf16.msra.mxu0 %v377
    %1552 = vmatmul.bf16.gmra.mxu0 %v1542
    %v1553 = vpop.f32.mrf.mxu0
    %v1554 = vadd.f32 %v367, %v1553
    %v1555 = vpop.f32.mrf.mxu0
    %1556 = vdwg.mxu0
    %v1557 = vtanh.pop %v1554
    %s1558 = scalar_lea.vmem %s3, 7
    %v1559 = vld [vmem:[%s1558] sm:$0x1]
    %v1561 = vperm.slane %v1559, 0
    %1562 = vset.pattern.permute.xlu0 0
    %1563 = vperm.xlu0 %1562, %v1561
    %v1564 = vpop.permute.xlu0 %1563
    %v1566 = vmul.f32 %v1557, %v1564
    %v1567 = vadd.f32 %v1406, %v1566
    %s1568 = scalar_lea.vmem [#allocation3], 28
    %v1569 = vld [vmem:[%s1568] sm:$0xf]
    %v1570 = vunpack.c.l.bf16 %v1569
    %v1571 = vmul.f32 %v1465, %v1570
    %v1572 = vadd.f32 %v1567, %v1571
    %1573 = vst.msk [vmem:[#allocation2] sm:$0xff] %vm184, %v1572
    // Predicated region
    $region78: #{tpu_custom_call.1} parent=1 // pred_check
      %p1574 = pneg %p122
    $region79: #{tpu_custom_call.1} parent=1 // pred_check_branch
      %1576 = sbr.rel (%p1574) target = $region81
    $region80: #{tpu_custom_call.1} parent=1 // pred_region
      %v1577 = vld [vmem:[#allocation11] sm:$0xff]
      %v1578 = vld [vmem:[#allocation11 + $0x8] sm:$0xff]
      %v1579 = vld [vmem:[#allocation11 + $0x10] sm:$0xff]
      %v1580 = vld [vmem:[#allocation11 + $0x18] sm:$0xff]
      %v1581 = vld [vmem:[%s12] sm:$0x1]
      %v1583 = vperm.slane %v1581, 0
      %v1586 = vsel %vm184, %v1572, 0
      %1588 = vmatpush.msra.mxu0 0.0
      %1589 = vmatpush.msra.mxu0 0.0
      %1590 = vmatpush.msra.mxu0 0.0
      %1591 = vmatpush.msra.mxu0 0.0
      %1592 = vmatpush.msra.mxu0 0.0
      %1593 = vmatpush.msra.mxu0 0.0
      %1594 = vmatpush.msra.mxu0 0.0
      %1595 = vmatpush.msra.mxu0 0.0
      %1596 = vmatpush.msra.mxu0 0.0
      %1597 = vmatpush.msra.mxu0 0.0
      %1598 = vmatpush.msra.mxu0 0.0
      %1599 = vmatpush.msra.mxu0 0.0
      %1600 = vmatpush.msra.mxu0 %v1580
      %1601 = vmatpush.msra.mxu0 %v1579
      %1602 = vmatpush.msra.mxu0 %v1578
      %1603 = vmatpush.msra.mxu0 %v1577
      %1604 = vmatmul.f32.gmra.mxu0 %v1586
      %v1605 = vpop.f32.mrf.mxu0
      %v1606 = vadd.f32 %v1583, %v1605
      %1607 = vdwg.mxu0
      %1608 = vst [vmem:[#allocation12] sm:$0xff] %v1606
    $region81: #{tpu_custom_call.1} parent=1 // pred_fallthru
      _
    // Predicated region
    $region82: #{tpu_custom_call.1} parent=1 // pred_check
      _
    $region83: #{tpu_custom_call.1} parent=1 // pred_check_branch
      %1610 = sbr.rel (0) target = $region85
    $region84: #{tpu_custom_call.1} parent=1 // pred_region
      %1612 = vsyncadd [#allocation5], 0
      %s1614 = sshll.u32 [#allocation12], 4
      %s1615 = int_to_ptr.vmem [resolvable:$true] %s1614
      %s1616 = sshll.u32 %s13, 4
      %s1617 = int_to_ptr.hbm [resolvable:$true] %s1616
      %1619 = dma.vmem_to_hbm [thread:$0]  %s1615, 128, %s1617, [#allocation5]
    $region85: #{tpu_custom_call.1} parent=1 // pred_fallthru
      _
    // Predicated region
    $region86: #{tpu_custom_call.1} parent=1 // pred_check
      _
    $region87: #{tpu_custom_call.1} parent=1 // pred_check_branch
      %1621 = sbr.rel (0) target = $region89
    $region88: #{tpu_custom_call.1} parent=1 // pred_region
      %1623 = dma.done [#allocation5], 128
    $region89: #{tpu_custom_call.1} parent=1 // pred_fallthru
      _
    %1624 = vsyncpa [#allocation4], 1
    %1625 = vsyncpa [#allocation7], 1
    %1626 = vsyncpa [#allocation10], 1
    %1627 = vsyncpa [#allocation5], 1

</llo_original>
